<compile_context>
chip_gen: v7x
topology: tpu7x:2x2x1
jax: 0.10.0
libtpu: 0.0.40
codegen_flags: <defaults>
</compile_context>

<pallas_src>
import numpy as np
import jax
import jax.numpy as jnp
from jax.experimental import pallas as pl
from jax.experimental.pallas import tpu as pltpu


def make_blurdown_kernel(H, W, Cin, Cout, a=(1.0, 3.0, 3.0, 1.0)):
    """Fused conv3x3(pad=1) + bias + LeakyReLU(0.1) + reflect-pad[1,2,1,2] + 4x4 blur s2."""
    assert H % 2 == 0 and W % 2 == 0 and H >= 4 and W >= 4, "even H,W >= 4 required"
    Ho, Wo = H // 2, W // 2
    a0, a1, a2, a3 = (float(v) for v in a)
    inv_norm = 1.0 / ((a0 + a1 + a2 + a3) ** 2)      # normalization of the 2-D binomial filter

    def kernel(x_ref, w_ref, b_ref, o_ref):
        # x_ref: (1, H, W, Cin)      bf16  unpadded NHWC input tile
        # w_ref: (9*Cin, Cout)       bf16  conv weights, K ordered (ky, kx, cin)
        # b_ref: (1, Cout)           f32
        # o_ref: (1, Ho, Wo*Cout)    f32   lane-dense output slab

        # ---- in-kernel zero pad (no wrapper-side padded HBM copy) --------------------
        x = x_ref[0]                                             # (H, W, Cin) bf16
        zc = jnp.zeros((H, 1, Cin), x.dtype)
        zr = jnp.zeros((1, W + 2, Cin), x.dtype)
        xp = jnp.concatenate([zr, jnp.concatenate([zc, x, zc], axis=1), zr],
                             axis=0)                             # (H+2, W+2, Cin) bf16

        # ---- fused im2col -> ONE MXU matmul (bf16 operands, f32 accumulate) ----------
        taps = [xp[dy:dy + H, dx:dx + W, :].reshape(H * W, Cin)
                for dy in range(3) for dx in range(3)]
        slab = jnp.concatenate(taps, axis=1)                     # (H*W, 9*Cin) bf16
        y = jnp.dot(slab, w_ref[...], preferred_element_type=jnp.float32)  # (H*W, Cout)

        # ---- bias + LeakyReLU(0.1), f32 ----------------------------------------------
        y = y + b_ref[...]
        y = jnp.where(y >= 0.0, y, 0.1 * y)
        y = y.reshape(H, W, Cout)

        # ---- separable 4x4 blur, stride 2, reflect pad [left1,right2,top1,bottom2].
        # The 2nd reflected bottom/right sample is never reached by the stride-2 taps,
        # so 1 front + 1 back reflected row/col (even length H+2 / W+2) suffices.
        # Vertical pass: even/odd phase split via a major-dim reshape.
        yr = jnp.concatenate([y[1:2], y, y[H - 2:H - 1]], axis=0)          # (H+2, W, C)
        q = yr.reshape(Ho + 1, 2, W, Cout)
        ev, od = q[:, 0], q[:, 1]                                          # (Ho+1, W, C)
        tv = (a0 * ev[0:Ho] + a1 * od[0:Ho]
              + a2 * ev[1:Ho + 1] + a3 * od[1:Ho + 1])                     # (Ho, W, C)

        # Horizontal pass: same phase split, fully vectorized (no per-column loop).
        tr = jnp.concatenate([tv[:, 1:2], tv, tv[:, W - 2:W - 1]], axis=1)  # (Ho, W+2, C)
        qh = tr.reshape(Ho, Wo + 1, 2, Cout)
        evh, odh = qh[:, :, 0], qh[:, :, 1]                                # (Ho, Wo+1, C)
        out = (a0 * evh[:, 0:Wo] + a1 * odh[:, 0:Wo]
               + a2 * evh[:, 1:Wo + 1] + a3 * odh[:, 1:Wo + 1])            # (Ho, Wo, C)

        # ---- single lane-dense store (Wo*Cout lanes) ----------------------------------
        o_ref[...] = (out * inv_norm).reshape(1, Ho, Wo * Cout)

    return kernel


def blur_down_forward(x_nchw, w_oihw, bias):
    N, Cin, H, W = x_nchw.shape
    Cout = w_oihw.shape[0]
    Ho, Wo = H // 2, W // 2

    # NHWC + bf16 for MXU operands / halved input HBM bytes; NO wrapper-side padding.
    x = jnp.transpose(x_nchw, (0, 2, 3, 1)).astype(jnp.bfloat16)            # (N,H,W,Cin)
    # (O,I,ky,kx) -> (ky,kx,I,O) -> (9*Cin, Cout), K ordered (ky, kx, cin).
    w2 = jnp.transpose(w_oihw, (2, 3, 1, 0)).reshape(9 * Cin, Cout).astype(jnp.bfloat16)
    b = bias.reshape(1, Cout).astype(jnp.float32)

    kernel = make_blurdown_kernel(H, W, Cin, Cout)
    out = pl.pallas_call(
        kernel,
        out_shape=jax.ShapeDtypeStruct((N, Ho, Wo * Cout), jnp.float32),
        grid=(N,),
        in_specs=[pl.BlockSpec((1, H, W, Cin), lambda n: (n, 0, 0, 0)),
                  pl.BlockSpec((9 * Cin, Cout), lambda n: (0, 0)),
                  pl.BlockSpec((1, Cout), lambda n: (0, 0))],
        out_specs=pl.BlockSpec((1, Ho, Wo * Cout), lambda n: (n, 0, 0)),
        compiler_params=pltpu.CompilerParams(dimension_semantics=("parallel",)),
    )(x, w2, b)
    out = out.reshape(N, Ho, Wo, Cout)
    return jnp.transpose(out, (0, 3, 1, 2))                                 # back to NCHW


# ---------------- Pure-JAX reference (for verification) --------------------------------
def reference(x_nchw, w_oihw, bias, filt2d):
    y = jax.lax.conv_general_dilated(
        x_nchw, w_oihw, window_strides=(1, 1), padding=((1, 1), (1, 1)),
        dimension_numbers=("NCHW", "OIHW", "NCHW"))
    y = y + bias[None, :, None, None]
    y = jnp.where(y >= 0, y, 0.1 * y)
    yp = jnp.pad(y, ((0, 0), (0, 0), (1, 2), (1, 2)), mode="reflect")
    C = y.shape[1]
    fw = jnp.broadcast_to(filt2d[None, None], (C, 1, 4, 4))
    return jax.lax.conv_general_dilated(
        yp, fw, window_strides=(2, 2), padding="VALID",
        dimension_numbers=("NCHW", "OIHW", "NCHW"), feature_group_count=C)


if __name__ == "__main__":
    key = jax.random.PRNGKey(0)
    N, Cin, H, W = 2, 4, 16, 16
    Cout = 8
    k1, k2, k3 = jax.random.split(key, 3)

    x = jax.random.normal(k1, (N, Cin, H, W), jnp.float32)
    bound = 1.0 / np.sqrt(Cin * 9)                   # deterministic synthetic params
    w = jax.random.uniform(k2, (Cout, Cin, 3, 3), jnp.float32, -bound, bound)
    b = jax.random.uniform(k3, (Cout,), jnp.float32, -bound, bound)

    out = jax.jit(blur_down_forward)(x, w, b)
    out = jax.block_until_ready(out)

    a = jnp.array([1.0, 3.0, 3.0, 1.0], jnp.float32)
    filt2d = (a[:, None] * a[None, :]) / jnp.sum(a[:, None] * a[None, :])
    ref = reference(x, w, b, filt2d)

    assert out.shape == (N, Cout, H // 2, W // 2), out.shape
    np.testing.assert_allclose(np.asarray(out), np.asarray(ref), atol=2e-2, rtol=2e-2)
    print("KERNEL_OK")
</pallas_src>

<mosaic_0001>
module attributes {stable_mosaic.version = 11 : i64} {
  func.func @kernel(%arg0: i32, %arg1: memref<1x16x16x4xbf16, #tpu.memory_space<vmem>>, %arg2: memref<36x8xbf16, #tpu.memory_space<vmem>>, %arg3: memref<1x8xf32, #tpu.memory_space<vmem>>, %arg4: memref<1x8x64xf32, #tpu.memory_space<vmem>>) attributes {dimension_semantics = [#tpu.dimension_semantics<parallel>], iteration_bounds = array<i64: 2>, scalar_prefetch = 0 : i64, scratch_operands = 0 : i64, tpu.core_type = #tpu.core_type<tc>, window_params = [{transform_indices = @transform_0, window_bounds = array<i64: 1, 16, 16, 4>}, {pipeline_mode = #tpu.pipeline_mode<synchronous>, transform_indices = @transform_1, window_bounds = array<i64: 36, 8>}, {pipeline_mode = #tpu.pipeline_mode<synchronous>, transform_indices = @transform_2, window_bounds = array<i64: 1, 8>}, {transform_indices = @transform_3, window_bounds = array<i64: 1, 8, 64>}]} {
    %c0 = arith.constant 0 : index
    %c0_0 = arith.constant 0 : index
    %c0_1 = arith.constant 0 : index
    %c0_2 = arith.constant 0 : index
    %0 = vector.load %arg1[%c0, %c0_0, %c0_1, %c0_2] : memref<1x16x16x4xbf16, #tpu.memory_space<vmem>>, vector<1x16x16x4xbf16>
    %1 = vector.shape_cast %0 : vector<1x16x16x4xbf16> to vector<16x16x4xbf16>
    %cst = arith.constant 0.000000e+00 : bf16
    %2 = vector.broadcast %cst : bf16 to vector<16x1x4xbf16>
    %cst_3 = arith.constant 0.000000e+00 : bf16
    %3 = vector.broadcast %cst_3 : bf16 to vector<1x18x4xbf16>
    %4 = tpu.concatenate %2, %1, %2 in 1 : vector<16x1x4xbf16>, vector<16x16x4xbf16>, vector<16x1x4xbf16> -> vector<16x18x4xbf16>
    %5 = tpu.concatenate %3, %4, %3 in 0 : vector<1x18x4xbf16>, vector<16x18x4xbf16>, vector<1x18x4xbf16> -> vector<18x18x4xbf16>
    %6 = vector.extract_strided_slice %5 {offsets = [0, 0, 0], sizes = [16, 16, 4], strides = [1, 1, 1]} : vector<18x18x4xbf16> to vector<16x16x4xbf16>
    %7 = vector.shape_cast %6 : vector<16x16x4xbf16> to vector<256x4xbf16>
    %8 = vector.extract_strided_slice %5 {offsets = [0, 1, 0], sizes = [16, 16, 4], strides = [1, 1, 1]} : vector<18x18x4xbf16> to vector<16x16x4xbf16>
    %9 = vector.shape_cast %8 : vector<16x16x4xbf16> to vector<256x4xbf16>
    %10 = vector.extract_strided_slice %5 {offsets = [0, 2, 0], sizes = [16, 16, 4], strides = [1, 1, 1]} : vector<18x18x4xbf16> to vector<16x16x4xbf16>
    %11 = vector.shape_cast %10 : vector<16x16x4xbf16> to vector<256x4xbf16>
    %12 = vector.extract_strided_slice %5 {offsets = [1, 0, 0], sizes = [16, 16, 4], strides = [1, 1, 1]} : vector<18x18x4xbf16> to vector<16x16x4xbf16>
    %13 = vector.shape_cast %12 : vector<16x16x4xbf16> to vector<256x4xbf16>
    %14 = vector.extract_strided_slice %5 {offsets = [1, 1, 0], sizes = [16, 16, 4], strides = [1, 1, 1]} : vector<18x18x4xbf16> to vector<16x16x4xbf16>
    %15 = vector.shape_cast %14 : vector<16x16x4xbf16> to vector<256x4xbf16>
    %16 = vector.extract_strided_slice %5 {offsets = [1, 2, 0], sizes = [16, 16, 4], strides = [1, 1, 1]} : vector<18x18x4xbf16> to vector<16x16x4xbf16>
    %17 = vector.shape_cast %16 : vector<16x16x4xbf16> to vector<256x4xbf16>
    %18 = vector.extract_strided_slice %5 {offsets = [2, 0, 0], sizes = [16, 16, 4], strides = [1, 1, 1]} : vector<18x18x4xbf16> to vector<16x16x4xbf16>
    %19 = vector.shape_cast %18 : vector<16x16x4xbf16> to vector<256x4xbf16>
    %20 = vector.extract_strided_slice %5 {offsets = [2, 1, 0], sizes = [16, 16, 4], strides = [1, 1, 1]} : vector<18x18x4xbf16> to vector<16x16x4xbf16>
    %21 = vector.shape_cast %20 : vector<16x16x4xbf16> to vector<256x4xbf16>
    %22 = vector.extract_strided_slice %5 {offsets = [2, 2, 0], sizes = [16, 16, 4], strides = [1, 1, 1]} : vector<18x18x4xbf16> to vector<16x16x4xbf16>
    %23 = vector.shape_cast %22 : vector<16x16x4xbf16> to vector<256x4xbf16>
    %24 = tpu.concatenate %7, %9, %11, %13, %15, %17, %19, %21, %23 in 1 : vector<256x4xbf16>, vector<256x4xbf16>, vector<256x4xbf16>, vector<256x4xbf16>, vector<256x4xbf16>, vector<256x4xbf16>, vector<256x4xbf16>, vector<256x4xbf16>, vector<256x4xbf16> -> vector<256x36xbf16>
    %c0_4 = arith.constant 0 : index
    %c0_5 = arith.constant 0 : index
    %25 = vector.load %arg2[%c0_4, %c0_5] : memref<36x8xbf16, #tpu.memory_space<vmem>>, vector<36x8xbf16>
    %cst_6 = arith.constant dense<0.000000e+00> : vector<256x8xf32>
    %26 = tpu.matmul %24, %25, %cst_6 {dimension_numbers = #tpu.dot_dimension_numbers<[1], [0], [0], [1], [0, 0, 1, 1], [], []>} : vector<256x36xbf16>, vector<36x8xbf16>, vector<256x8xf32> -> vector<256x8xf32>
    %c0_7 = arith.constant 0 : index
    %c0_8 = arith.constant 0 : index
    %27 = vector.load %arg3[%c0_7, %c0_8] : memref<1x8xf32, #tpu.memory_space<vmem>>, vector<1x8xf32>
    %28 = vector.broadcast %27 : vector<1x8xf32> to vector<256x8xf32>
    %29 = arith.addf %26, %28 : vector<256x8xf32>
    %cst_9 = arith.constant 0.000000e+00 : f32
    %30 = vector.broadcast %cst_9 : f32 to vector<256x8xf32>
    %31 = arith.cmpf oge, %29, %30 : vector<256x8xf32>
    %cst_10 = arith.constant 1.000000e-01 : f32
    %32 = vector.broadcast %cst_10 : f32 to vector<256x8xf32>
    %33 = arith.mulf %32, %29 : vector<256x8xf32>
    %34 = arith.select %31, %29, %33 : vector<256x8xi1>, vector<256x8xf32>
    %35 = vector.shape_cast %34 : vector<256x8xf32> to vector<16x16x8xf32>
    %36 = vector.extract_strided_slice %35 {offsets = [1, 0, 0], sizes = [1, 16, 8], strides = [1, 1, 1]} : vector<16x16x8xf32> to vector<1x16x8xf32>
    %37 = vector.extract_strided_slice %35 {offsets = [14, 0, 0], sizes = [1, 16, 8], strides = [1, 1, 1]} : vector<16x16x8xf32> to vector<1x16x8xf32>
    %38 = tpu.concatenate %36, %35, %37 in 0 : vector<1x16x8xf32>, vector<16x16x8xf32>, vector<1x16x8xf32> -> vector<18x16x8xf32>
    %39 = vector.shape_cast %38 : vector<18x16x8xf32> to vector<9x2x16x8xf32>
    %40 = vector.extract_strided_slice %39 {offsets = [0, 0, 0, 0], sizes = [9, 1, 16, 8], strides = [1, 1, 1, 1]} : vector<9x2x16x8xf32> to vector<9x1x16x8xf32>
    %41 = vector.shape_cast %40 : vector<9x1x16x8xf32> to vector<9x16x8xf32>
    %42 = vector.extract_strided_slice %39 {offsets = [0, 1, 0, 0], sizes = [9, 1, 16, 8], strides = [1, 1, 1, 1]} : vector<9x2x16x8xf32> to vector<9x1x16x8xf32>
    %43 = vector.shape_cast %42 : vector<9x1x16x8xf32> to vector<9x16x8xf32>
    %44 = vector.extract_strided_slice %41 {offsets = [0, 0, 0], sizes = [8, 16, 8], strides = [1, 1, 1]} : vector<9x16x8xf32> to vector<8x16x8xf32>
    %cst_11 = arith.constant 1.000000e+00 : f32
    %45 = vector.broadcast %cst_11 : f32 to vector<8x16x8xf32>
    %46 = arith.mulf %45, %44 : vector<8x16x8xf32>
    %47 = vector.extract_strided_slice %43 {offsets = [0, 0, 0], sizes = [8, 16, 8], strides = [1, 1, 1]} : vector<9x16x8xf32> to vector<8x16x8xf32>
    %cst_12 = arith.constant 3.000000e+00 : f32
    %48 = vector.broadcast %cst_12 : f32 to vector<8x16x8xf32>
    %49 = arith.mulf %48, %47 : vector<8x16x8xf32>
    %50 = arith.addf %46, %49 : vector<8x16x8xf32>
    %51 = vector.extract_strided_slice %41 {offsets = [1, 0, 0], sizes = [8, 16, 8], strides = [1, 1, 1]} : vector<9x16x8xf32> to vector<8x16x8xf32>
    %cst_13 = arith.constant 3.000000e+00 : f32
    %52 = vector.broadcast %cst_13 : f32 to vector<8x16x8xf32>
    %53 = arith.mulf %52, %51 : vector<8x16x8xf32>
    %54 = arith.addf %50, %53 : vector<8x16x8xf32>
    %55 = vector.extract_strided_slice %43 {offsets = [1, 0, 0], sizes = [8, 16, 8], strides = [1, 1, 1]} : vector<9x16x8xf32> to vector<8x16x8xf32>
    %cst_14 = arith.constant 1.000000e+00 : f32
    %56 = vector.broadcast %cst_14 : f32 to vector<8x16x8xf32>
    %57 = arith.mulf %56, %55 : vector<8x16x8xf32>
    %58 = arith.addf %54, %57 : vector<8x16x8xf32>
    %59 = vector.extract_strided_slice %58 {offsets = [0, 1, 0], sizes = [8, 1, 8], strides = [1, 1, 1]} : vector<8x16x8xf32> to vector<8x1x8xf32>
    %60 = vector.extract_strided_slice %58 {offsets = [0, 14, 0], sizes = [8, 1, 8], strides = [1, 1, 1]} : vector<8x16x8xf32> to vector<8x1x8xf32>
    %61 = tpu.concatenate %59, %58, %60 in 1 : vector<8x1x8xf32>, vector<8x16x8xf32>, vector<8x1x8xf32> -> vector<8x18x8xf32>
    %62 = vector.shape_cast %61 : vector<8x18x8xf32> to vector<8x9x2x8xf32>
    %63 = vector.extract_strided_slice %62 {offsets = [0, 0, 0, 0], sizes = [8, 9, 1, 8], strides = [1, 1, 1, 1]} : vector<8x9x2x8xf32> to vector<8x9x1x8xf32>
    %64 = vector.shape_cast %63 : vector<8x9x1x8xf32> to vector<8x9x8xf32>
    %65 = vector.extract_strided_slice %62 {offsets = [0, 0, 1, 0], sizes = [8, 9, 1, 8], strides = [1, 1, 1, 1]} : vector<8x9x2x8xf32> to vector<8x9x1x8xf32>
    %66 = vector.shape_cast %65 : vector<8x9x1x8xf32> to vector<8x9x8xf32>
    %67 = vector.extract_strided_slice %64 {offsets = [0, 0, 0], sizes = [8, 8, 8], strides = [1, 1, 1]} : vector<8x9x8xf32> to vector<8x8x8xf32>
    %cst_15 = arith.constant 1.000000e+00 : f32
    %68 = vector.broadcast %cst_15 : f32 to vector<8x8x8xf32>
    %69 = arith.mulf %68, %67 : vector<8x8x8xf32>
    %70 = vector.extract_strided_slice %66 {offsets = [0, 0, 0], sizes = [8, 8, 8], strides = [1, 1, 1]} : vector<8x9x8xf32> to vector<8x8x8xf32>
    %cst_16 = arith.constant 3.000000e+00 : f32
    %71 = vector.broadcast %cst_16 : f32 to vector<8x8x8xf32>
    %72 = arith.mulf %71, %70 : vector<8x8x8xf32>
    %73 = arith.addf %69, %72 : vector<8x8x8xf32>
    %74 = vector.extract_strided_slice %64 {offsets = [0, 1, 0], sizes = [8, 8, 8], strides = [1, 1, 1]} : vector<8x9x8xf32> to vector<8x8x8xf32>
    %cst_17 = arith.constant 3.000000e+00 : f32
    %75 = vector.broadcast %cst_17 : f32 to vector<8x8x8xf32>
    %76 = arith.mulf %75, %74 : vector<8x8x8xf32>
    %77 = arith.addf %73, %76 : vector<8x8x8xf32>
    %78 = vector.extract_strided_slice %66 {offsets = [0, 1, 0], sizes = [8, 8, 8], strides = [1, 1, 1]} : vector<8x9x8xf32> to vector<8x8x8xf32>
    %cst_18 = arith.constant 1.000000e+00 : f32
    %79 = vector.broadcast %cst_18 : f32 to vector<8x8x8xf32>
    %80 = arith.mulf %79, %78 : vector<8x8x8xf32>
    %81 = arith.addf %77, %80 : vector<8x8x8xf32>
    %cst_19 = arith.constant 1.562500e-02 : f32
    %82 = vector.broadcast %cst_19 : f32 to vector<8x8x8xf32>
    %83 = arith.mulf %81, %82 : vector<8x8x8xf32>
    %84 = vector.shape_cast %83 : vector<8x8x8xf32> to vector<1x8x64xf32>
    %c0_20 = arith.constant 0 : index
    %c0_21 = arith.constant 0 : index
    %c0_22 = arith.constant 0 : index
    %85 = vector.load %arg4[%c0_20, %c0_21, %c0_22] : memref<1x8x64xf32, #tpu.memory_space<vmem>>, vector<1x8x64xf32>
    tpu.vector_store %arg4[%c0_20, %c0_21, %c0_22], %84 {strides = array<i32>} : memref<1x8x64xf32, #tpu.memory_space<vmem>>, vector<1x8x64xf32>,
    return
  }
  func.func @transform_0(%arg0: i32) -> (i32, i32, i32, i32) {
    %c0_i32 = arith.constant 0 : i32
    %c0_i32_0 = arith.constant 0 : i32
    %c0_i32_1 = arith.constant 0 : i32
    %c0_i32_2 = arith.constant 0 : i32
    return %arg0, %c0_i32, %c0_i32_0, %c0_i32_1 : i32, i32, i32, i32
  }
  func.func @transform_1(%arg0: i32) -> (i32, i32) {
    %c0_i32 = arith.constant 0 : i32
    %c0_i32_0 = arith.constant 0 : i32
    %c0_i32_1 = arith.constant 0 : i32
    return %c0_i32, %c0_i32_0 : i32, i32
  }
  func.func @transform_2(%arg0: i32) -> (i32, i32) {
    %c0_i32 = arith.constant 0 : i32
    %c0_i32_0 = arith.constant 0 : i32
    %c0_i32_1 = arith.constant 0 : i32
    return %c0_i32, %c0_i32_0 : i32, i32
  }
  func.func @transform_3(%arg0: i32) -> (i32, i32, i32) {
    %c0_i32 = arith.constant 0 : i32
    %c0_i32_0 = arith.constant 0 : i32
    %c0_i32_1 = arith.constant 0 : i32
    return %arg0, %c0_i32, %c0_i32_0 : i32, i32, i32
  }
}

</mosaic_0001>

<llo_original>
// kernel: blur_down_forward.1
$region0: #{blur_down_forward.1}
  #allocation0 [shape = 'u32[]', space=smem, size = 0x4, offset = 0x4, fixed_abs, tag = 'smem constant byte address 0x4 - core index']
  #allocation1 [shape = 'u32[144,128]{1,0:T(1,128)}', space=vmem, size = 0x12000, scoped, tag = 'internal scratch']
  %s0 = inlined_call_operand.vmem [shape: bf16[2,16,16,4], index: 0, kind: input, shape index: {}]
  %s1 = inlined_call_operand.vmem [shape: bf16[36,8], index: 1, kind: input, shape index: {}]
  %s2 = inlined_call_operand.vmem [shape: f32[1,8], index: 2, kind: input, shape index: {}]
  %s3 = inlined_call_operand.vmem [shape: f32[2,8,64], index: 3, kind: output, shape index: {}]
  %s4 = sld [smem:[#allocation0]]
  $region45: #{blur_down_forward.1} parent=0
    _
  %s6 = ssub.s32 1, %s4
  %s7 = scalar_select 0, %s6, %s4
  loop: start=0, step=1, limit=4
  $region2: #{blur_down_forward.1} parent=0 // loop_pre_header
    _
  $region3: #{blur_down_forward.1} parent=0 // loop_header
    %s9 = sphi 0, %s13
    %p10 = scmp.ge.s32.totalorder %s9, 4
    %s19 = sphi 0, %s21
    %s22 = sphi 0, %s19
    %s23 = sphi 0, %s22
    %s39 = sphi 0, %s23
    %s43 = sphi 0, %s43
    %s45 = sphi 0, %s43
    %s46 = sphi 0, %s45
    %s60 = sphi 0, %s46
    %s64 = sphi 0, %s64
    %s66 = sphi 0, %s64
    %s67 = sphi 0, %s66
    %s81 = sphi 0, %s67
    %s87 = sphi 0, %s89
    %s90 = sphi 0, %s87
    %s91 = sphi 0, %s90
    %s107 = sphi 0, %s91
  $region4: #{blur_down_forward.1} parent=0 // loop_header_branch
    %12 = sbr.rel (%p10) target = $region8
  $region5: #{blur_down_forward.1} parent=0 // loop_body
    %s14 = ssub.s32 %s9, 1
    %s15 = ssub.s32 %s9, 2
    %s16 = sadd.s32 %s9, 1
    %s17 = ssub.s32 %s9, %s16
    %p18 = scmp.eq.s32.totalorder %s17, 0
    %s20 = sadd.s32 %s19, 1
    %s21 = scalar_select %p18, %s19, %s20
    %p24 = pneg %p18
    %p25 = scmp.eq.s32.totalorder %s9, 1
    %p26 = por %p24, %p25
    %p27 = scmp.ne.s32.totalorder %s19, %s22
    %p28 = scmp.eq.s32.totalorder %s9, 0
    %p29 = por %p27, %p28
    %p30 = scmp.ne.s32.totalorder %s19, %s22
    %p31 = scmp.eq.s32.totalorder %s14, 1
    %p32 = por %p30, %p31
    %p33 = scmp.ne.s32.totalorder %s22, %s23
    %p34 = scmp.eq.s32.totalorder %s14, 0
    %p35 = por %p33, %p34
    %p36 = scmp.ne.s32.totalorder %s22, %s23
    %p37 = scmp.eq.s32.totalorder %s15, 1
    %p38 = por %p36, %p37
    %p40 = scmp.ne.s32.totalorder %s23, %s39
    %p41 = scmp.eq.s32.totalorder %s15, 0
    %p42 = por %p40, %p41
    %s44 = sadd.s32 %s43, 1
    %p47 = scmp.eq.s32.totalorder %s9, 1
    %p48 = scmp.ne.s32.totalorder %s43, %s45
    %p49 = scmp.eq.s32.totalorder %s9, 0
    %p50 = por %p48, %p49
    %p51 = scmp.ne.s32.totalorder %s43, %s45
    %p52 = scmp.eq.s32.totalorder %s14, 1
    %p53 = por %p51, %p52
    %p54 = scmp.ne.s32.totalorder %s45, %s46
    %p55 = scmp.eq.s32.totalorder %s14, 0
    %p56 = por %p54, %p55
    %p57 = scmp.ne.s32.totalorder %s45, %s46
    %p58 = scmp.eq.s32.totalorder %s15, 1
    %p59 = por %p57, %p58
    %p61 = scmp.ne.s32.totalorder %s46, %s60
    %p62 = scmp.eq.s32.totalorder %s15, 0
    %p63 = por %p61, %p62
    %s65 = sadd.s32 %s64, 1
    %p68 = scmp.eq.s32.totalorder %s9, 1
    %p69 = scmp.ne.s32.totalorder %s64, %s66
    %p70 = scmp.eq.s32.totalorder %s9, 0
    %p71 = por %p69, %p70
    %p72 = scmp.ne.s32.totalorder %s64, %s66
    %p73 = scmp.eq.s32.totalorder %s14, 1
    %p74 = por %p72, %p73
    %p75 = scmp.ne.s32.totalorder %s66, %s67
    %p76 = scmp.eq.s32.totalorder %s14, 0
    %p77 = por %p75, %p76
    %p78 = scmp.ne.s32.totalorder %s66, %s67
    %p79 = scmp.eq.s32.totalorder %s15, 1
    %p80 = por %p78, %p79
    %p82 = scmp.ne.s32.totalorder %s67, %s81
    %p83 = scmp.eq.s32.totalorder %s15, 0
    %p84 = por %p82, %p83
    %s85 = ssub.s32 %s9, %s16
    %p86 = scmp.eq.s32.totalorder %s85, 0
    %s88 = sadd.s32 %s87, 1
    %s89 = scalar_select %p86, %s87, %s88
    %p92 = pneg %p86
    %p93 = scmp.eq.s32.totalorder %s9, 1
    %p94 = por %p92, %p93
    %p95 = scmp.ne.s32.totalorder %s87, %s90
    %p96 = scmp.eq.s32.totalorder %s9, 0
    %p97 = por %p95, %p96
    %p98 = scmp.ne.s32.totalorder %s87, %s90
    %p99 = scmp.eq.s32.totalorder %s14, 1
    %p100 = por %p98, %p99
    %p101 = scmp.ne.s32.totalorder %s90, %s91
    %p102 = scmp.eq.s32.totalorder %s14, 0
    %p103 = por %p101, %p102
    %p104 = scmp.ne.s32.totalorder %s90, %s91
    %p105 = scmp.eq.s32.totalorder %s15, 1
    %p106 = por %p104, %p105
    %p108 = scmp.ne.s32.totalorder %s91, %s107
    %p109 = scmp.eq.s32.totalorder %s15, 0
    %p110 = por %p108, %p109
    %p111 = scmp.le.s32.totalorder 1, %s9
    %p112 = scmp.lt.s32.totalorder %s9, 3
    %p113 = pnand %p111, %p112
    %p114 = pneg %p113
    // Predicated region
    $region9: #{blur_down_forward.1} parent=5 // pred_check
      _
    $region10: #{blur_down_forward.1} parent=5 // pred_check_branch
      %116 = sbr.rel (%p113) target = $region12
    $region11: #{blur_down_forward.1} parent=5 // pred_region
      %s117 = ssub.s32 %s9, 1
      // Predicated region
      $region13: #{blur_down_forward.1} parent=11 // pred_check
        %p118 = pneg %p56
      $region14: #{blur_down_forward.1} parent=11 // pred_check_branch
        %120 = sbr.rel (%p118) target = $region16
      $region15: #{blur_down_forward.1} parent=11 // pred_region
        _
      $region16: #{blur_down_forward.1} parent=11 // pred_fallthru
        _
      // Predicated region
      $region17: #{blur_down_forward.1} parent=11 // pred_check
        %p121 = pneg %p77
      $region18: #{blur_down_forward.1} parent=11 // pred_check_branch
        %123 = sbr.rel (%p121) target = $region20
      $region19: #{blur_down_forward.1} parent=11 // pred_region
        _
      $region20: #{blur_down_forward.1} parent=11 // pred_fallthru
        _
    $region12: #{blur_down_forward.1} parent=5 // pred_fallthru
      _
    %p124 = scmp.lt.s32.totalorder %s9, 2
    // Predicated region
    $region21: #{blur_down_forward.1} parent=5 // pred_check
      %p125 = pneg %p124
    $region22: #{blur_down_forward.1} parent=5 // pred_check_branch
      %127 = sbr.rel (%p125) target = $region24
    $region23: #{blur_down_forward.1} parent=5 // pred_region
      // Predicated region
      $region25: #{blur_down_forward.1} parent=23 // pred_check
        %p128 = pneg %p29
      $region26: #{blur_down_forward.1} parent=23 // pred_check_branch
        %130 = sbr.rel (%p128) target = $region28
      $region27: #{blur_down_forward.1} parent=23 // pred_region
        %p131 = scmp.lt.s32.totalorder %s9, 1
        %s132 = scalar_select %p131, %s9, 1
        %s133 = smul.addr %s132, 32
        %s134 = smul.addr %s133, 4
        %s135 = scalar_lea.vmem %s0, %s134
      $region28: #{blur_down_forward.1} parent=23 // pred_fallthru
        _
    $region24: #{blur_down_forward.1} parent=5 // pred_fallthru
      _
    %p136 = scmp.le.s32.totalorder 1, %s9
    %p137 = scmp.lt.s32.totalorder %s9, 3
    %p138 = pnand %p136, %p137
    %p139 = pneg %p138
    // Predicated region
    $region29: #{blur_down_forward.1} parent=5 // pred_check
      _
    $region30: #{blur_down_forward.1} parent=5 // pred_check_branch
      %141 = sbr.rel (%p138) target = $region32
    $region31: #{blur_down_forward.1} parent=5 // pred_region
      %s142 = ssub.s32 %s9, 1
      %p143 = scmp.lt.s32.totalorder %s14, 1
      %s144 = scalar_select %p143, %s14, 1
      %s145 = smul.addr %s144, 32
      %s146 = smul.addr %s145, 4
      %s147 = scalar_lea.vmem %s0, %s146
      %p148 = pneg %p35
      %p149 = pneg %p32
      %p150 = pneg %p56
      %p151 = pneg %p53
      %p152 = pneg %p77
      %p153 = pneg %p74
      %p154 = pneg %p103
      %p155 = pneg %p100
      %p156 = scmp.lt.s32.totalorder %s14, 1
      %s157 = scalar_select %p156, %s14, 1
      %s158 = smul.addr %s157, 8
      %s159 = scalar_lea.vmem %s3, %s158
      %p160 = scmp.lt.s32.totalorder %s14, 1
      %s161 = scalar_select %p160, %s14, 1
      %s162 = smul.addr %s161, 32
      %s163 = smul.addr %s162, 4
      %s164 = scalar_lea.vmem %s0, %s163
      %p165 = scmp.lt.s32.totalorder %s14, 1
      %s166 = scalar_select %p165, %s14, 1
      %s167 = smul.addr %s166, 8
      %s168 = scalar_lea.vmem %s3, %s167
      %v170 = vld [vmem:[%s164] sm:$0xf]
      %v171 = vld [vmem:[%s164 + $0x4] sm:$0xf]
      %v172 = vld [vmem:[%s164 + $0x8] sm:$0xf]
      %v173 = vld [vmem:[%s164 + $0xc] sm:$0xf]
      %v174 = vld [vmem:[%s164 + $0x10] sm:$0xf]
      %v175 = vld [vmem:[%s164 + $0x14] sm:$0xf]
      %v176 = vld [vmem:[%s164 + $0x18] sm:$0xf]
      %v177 = vld [vmem:[%s164 + $0x1c] sm:$0xf]
      %v178 = vld [vmem:[%s164 + $0x20] sm:$0xf]
      %v179 = vld [vmem:[%s164 + $0x24] sm:$0xf]
      %v180 = vld [vmem:[%s164 + $0x28] sm:$0xf]
      %v181 = vld [vmem:[%s164 + $0x2c] sm:$0xf]
      %v182 = vld [vmem:[%s164 + $0x30] sm:$0xf]
      %v183 = vld [vmem:[%s164 + $0x34] sm:$0xf]
      %v184 = vld [vmem:[%s164 + $0x38] sm:$0xf]
      %v185 = vld [vmem:[%s164 + $0x3c] sm:$0xf]
      %v186 = vld [vmem:[%s164 + $0x40] sm:$0xf]
      %v187 = vld [vmem:[%s164 + $0x44] sm:$0xf]
      %v188 = vld [vmem:[%s164 + $0x48] sm:$0xf]
      %v189 = vld [vmem:[%s164 + $0x4c] sm:$0xf]
      %v190 = vld [vmem:[%s164 + $0x50] sm:$0xf]
      %v191 = vld [vmem:[%s164 + $0x54] sm:$0xf]
      %v192 = vld [vmem:[%s164 + $0x58] sm:$0xf]
      %v193 = vld [vmem:[%s164 + $0x5c] sm:$0xf]
      %v194 = vld [vmem:[%s164 + $0x60] sm:$0xf]
      %v195 = vld [vmem:[%s164 + $0x64] sm:$0xf]
      %v196 = vld [vmem:[%s164 + $0x68] sm:$0xf]
      %v197 = vld [vmem:[%s164 + $0x6c] sm:$0xf]
      %v198 = vld [vmem:[%s164 + $0x70] sm:$0xf]
      %v199 = vld [vmem:[%s164 + $0x74] sm:$0xf]
      %v200 = vld [vmem:[%s164 + $0x78] sm:$0xf]
      %v201 = vld [vmem:[%s164 + $0x7c] sm:$0xf]
      %v234 = vunpack.c.l.b16 %v170
      %v235 = vunpack.c.l.b16 %v171
      %v236 = vunpack.c.l.b16 %v172
      %v237 = vunpack.c.l.b16 %v173
      %v238 = vunpack.c.l.b16 %v174
      %v239 = vunpack.c.l.b16 %v175
      %v240 = vunpack.c.l.b16 %v176
      %v241 = vunpack.c.l.b16 %v177
      %v242 = vunpack.c.l.b16 %v178
      %v243 = vunpack.c.l.b16 %v179
      %v244 = vunpack.c.l.b16 %v180
      %v245 = vunpack.c.l.b16 %v181
      %v246 = vunpack.c.l.b16 %v182
      %v247 = vunpack.c.l.b16 %v183
      %v248 = vunpack.c.l.b16 %v184
      %v249 = vunpack.c.l.b16 %v185
      %v250 = vunpack.c.l.b16 %v186
      %v251 = vunpack.c.l.b16 %v187
      %v252 = vunpack.c.l.b16 %v188
      %v253 = vunpack.c.l.b16 %v189
      %v254 = vunpack.c.l.b16 %v190
      %v255 = vunpack.c.l.b16 %v191
      %v256 = vunpack.c.l.b16 %v192
      %v257 = vunpack.c.l.b16 %v193
      %v258 = vunpack.c.l.b16 %v194
      %v259 = vunpack.c.l.b16 %v195
      %v260 = vunpack.c.l.b16 %v196
      %v261 = vunpack.c.l.b16 %v197
      %v262 = vunpack.c.l.b16 %v198
      %v263 = vunpack.c.l.b16 %v199
      %v264 = vunpack.c.l.b16 %v200
      %v265 = vunpack.c.l.b16 %v201
      %v266 = vpack.c.b16 %v235, %v234
      %v267 = vpack.c.b16 %v237, %v236
      %v268 = vpack.c.b16 %v239, %v238
      %v269 = vpack.c.b16 %v241, %v240
      %v270 = vpack.c.b16 %v243, %v242
      %v271 = vpack.c.b16 %v245, %v244
      %v272 = vpack.c.b16 %v247, %v246
      %v273 = vpack.c.b16 %v249, %v248
      %v274 = vpack.c.b16 %v251, %v250
      %v275 = vpack.c.b16 %v253, %v252
      %v276 = vpack.c.b16 %v255, %v254
      %v277 = vpack.c.b16 %v257, %v256
      %v278 = vpack.c.b16 %v259, %v258
      %v279 = vpack.c.b16 %v261, %v260
      %v280 = vpack.c.b16 %v263, %v262
      %v281 = vpack.c.b16 %v265, %v264
      %v283 = vshrl.u32 %v266, 16
      %v285 = vrot.slane %v283, 7
      %v286 = vshll.u32 %v266, 16
      %v288 = vor.u32 %v285, %v286
      %v290 = vshrl.u32 %v267, 16
      %v292 = vrot.slane %v290, 7
      %v293 = vshll.u32 %v267, 16
      %v295 = vor.u32 %v292, %v293
      %v297 = vshrl.u32 %v268, 16
      %v299 = vrot.slane %v297, 7
      %v300 = vshll.u32 %v268, 16
      %v302 = vor.u32 %v299, %v300
      %v304 = vshrl.u32 %v269, 16
      %v306 = vrot.slane %v304, 7
      %v307 = vshll.u32 %v269, 16
      %v309 = vor.u32 %v306, %v307
      %v311 = vshrl.u32 %v270, 16
      %v313 = vrot.slane %v311, 7
      %v314 = vshll.u32 %v270, 16
      %v316 = vor.u32 %v313, %v314
      %v318 = vshrl.u32 %v271, 16
      %v320 = vrot.slane %v318, 7
      %v321 = vshll.u32 %v271, 16
      %v323 = vor.u32 %v320, %v321
      %v325 = vshrl.u32 %v272, 16
      %v327 = vrot.slane %v325, 7
      %v328 = vshll.u32 %v272, 16
      %v330 = vor.u32 %v327, %v328
      %v332 = vshrl.u32 %v273, 16
      %v334 = vrot.slane %v332, 7
      %v335 = vshll.u32 %v273, 16
      %v337 = vor.u32 %v334, %v335
      %v339 = vshrl.u32 %v274, 16
      %v341 = vrot.slane %v339, 7
      %v342 = vshll.u32 %v274, 16
      %v344 = vor.u32 %v341, %v342
      %v346 = vshrl.u32 %v275, 16
      %v348 = vrot.slane %v346, 7
      %v349 = vshll.u32 %v275, 16
      %v351 = vor.u32 %v348, %v349
      %v353 = vshrl.u32 %v276, 16
      %v355 = vrot.slane %v353, 7
      %v356 = vshll.u32 %v276, 16
      %v358 = vor.u32 %v355, %v356
      %v360 = vshrl.u32 %v277, 16
      %v362 = vrot.slane %v360, 7
      %v363 = vshll.u32 %v277, 16
      %v365 = vor.u32 %v362, %v363
      %v367 = vshrl.u32 %v278, 16
      %v369 = vrot.slane %v367, 7
      %v370 = vshll.u32 %v278, 16
      %v372 = vor.u32 %v369, %v370
      %v374 = vshrl.u32 %v279, 16
      %v376 = vrot.slane %v374, 7
      %v377 = vshll.u32 %v279, 16
      %v379 = vor.u32 %v376, %v377
      %v381 = vshrl.u32 %v280, 16
      %v383 = vrot.slane %v381, 7
      %v384 = vshll.u32 %v280, 16
      %v386 = vor.u32 %v383, %v384
      %v388 = vshrl.u32 %v281, 16
      %v390 = vrot.slane %v388, 7
      %v391 = vshll.u32 %v281, 16
      %v393 = vor.u32 %v390, %v391
      %vm426 = vcmask 1040384
      %vm427 = vsmask.f32 256
      %vm428 = vmand %vm426, %vm427
      %v429 = vsel %vm428, 0, %v288
      %v430 = vsel %vm428, 0, %v295
      %v431 = vsel %vm428, 0, %v302
      %v432 = vsel %vm428, 0, %v309
      %v433 = vsel %vm428, 0, %v316
      %v434 = vsel %vm428, 0, %v323
      %v435 = vsel %vm428, 0, %v330
      %v436 = vsel %vm428, 0, %v337
      %v437 = vsel %vm428, 0, %v344
      %v438 = vsel %vm428, 0, %v351
      %v439 = vsel %vm428, 0, %v358
      %v440 = vsel %vm428, 0, %v365
      %v441 = vsel %vm428, 0, %v372
      %v442 = vsel %vm428, 0, %v379
      %v443 = vsel %vm428, 0, %v386
      %v444 = vsel %vm428, 0, %v393
      %v445 = vsel %vm428, %v285, 0
      %v446 = vsel %vm428, %v292, 0
      %v447 = vsel %vm428, %v299, 0
      %v448 = vsel %vm428, %v306, 0
      %v449 = vsel %vm428, %v313, 0
      %v450 = vsel %vm428, %v320, 0
      %v451 = vsel %vm428, %v327, 0
      %v452 = vsel %vm428, %v334, 0
      %v453 = vsel %vm428, %v341, 0
      %v454 = vsel %vm428, %v348, 0
      %v455 = vsel %vm428, %v355, 0
      %v456 = vsel %vm428, %v362, 0
      %v457 = vsel %vm428, %v369, 0
      %v458 = vsel %vm428, %v376, 0
      %v459 = vsel %vm428, %v383, 0
      %v460 = vsel %vm428, %v390, 0
      %vm461 = vsmask.f32 7424
      %v463 = vshrl.u32 0, 16
      %v465 = vshll.u32 0, 16
      %v467 = vrot.slane %v465, 1
      %v468 = vor.u32 %v463, %v467
      %v469 = vsel %vm461, %v468, %v467
      %v471 = vshrl.u32 %v429, 16
      %v473 = vshll.u32 %v429, 16
      %v475 = vrot.slane %v473, 1
      %v476 = vor.u32 %v471, %v475
      %v478 = vshll.u32 %v445, 16
      %v480 = vrot.slane %v478, 1
      %v481 = vsel %vm461, %v476, %v480
      %v483 = vshrl.u32 %v430, 16
      %v485 = vshll.u32 %v430, 16
      %v487 = vrot.slane %v485, 1
      %v488 = vor.u32 %v483, %v487
      %v490 = vshll.u32 %v446, 16
      %v492 = vrot.slane %v490, 1
      %v493 = vsel %vm461, %v488, %v492
      %v495 = vshrl.u32 %v431, 16
      %v497 = vshll.u32 %v431, 16
      %v499 = vrot.slane %v497, 1
      %v500 = vor.u32 %v495, %v499
      %v502 = vshll.u32 %v447, 16
      %v504 = vrot.slane %v502, 1
      %v505 = vsel %vm461, %v500, %v504
      %v507 = vshrl.u32 %v432, 16
      %v509 = vshll.u32 %v432, 16
      %v511 = vrot.slane %v509, 1
      %v512 = vor.u32 %v507, %v511
      %v514 = vshll.u32 %v448, 16
      %v516 = vrot.slane %v514, 1
      %v517 = vsel %vm461, %v512, %v516
      %v519 = vshrl.u32 %v433, 16
      %v521 = vshll.u32 %v433, 16
      %v523 = vrot.slane %v521, 1
      %v524 = vor.u32 %v519, %v523
      %v526 = vshll.u32 %v449, 16
      %v528 = vrot.slane %v526, 1
      %v529 = vsel %vm461, %v524, %v528
      %v531 = vshrl.u32 %v434, 16
      %v533 = vshll.u32 %v434, 16
      %v535 = vrot.slane %v533, 1
      %v536 = vor.u32 %v531, %v535
      %v538 = vshll.u32 %v450, 16
      %v540 = vrot.slane %v538, 1
      %v541 = vsel %vm461, %v536, %v540
      %v543 = vshrl.u32 %v435, 16
      %v545 = vshll.u32 %v435, 16
      %v547 = vrot.slane %v545, 1
      %v548 = vor.u32 %v543, %v547
      %v550 = vshll.u32 %v451, 16
      %v552 = vrot.slane %v550, 1
      %v553 = vsel %vm461, %v548, %v552
      %v555 = vshrl.u32 %v436, 16
      %v557 = vshll.u32 %v436, 16
      %v559 = vrot.slane %v557, 1
      %v560 = vor.u32 %v555, %v559
      %v562 = vshll.u32 %v452, 16
      %v564 = vrot.slane %v562, 1
      %v565 = vsel %vm461, %v560, %v564
      %v567 = vshrl.u32 %v437, 16
      %v569 = vshll.u32 %v437, 16
      %v571 = vrot.slane %v569, 1
      %v572 = vor.u32 %v567, %v571
      %v574 = vshll.u32 %v453, 16
      %v576 = vrot.slane %v574, 1
      %v577 = vsel %vm461, %v572, %v576
      %v579 = vshrl.u32 %v438, 16
      %v581 = vshll.u32 %v438, 16
      %v583 = vrot.slane %v581, 1
      %v584 = vor.u32 %v579, %v583
      %v586 = vshll.u32 %v454, 16
      %v588 = vrot.slane %v586, 1
      %v589 = vsel %vm461, %v584, %v588
      %v591 = vshrl.u32 %v439, 16
      %v593 = vshll.u32 %v439, 16
      %v595 = vrot.slane %v593, 1
      %v596 = vor.u32 %v591, %v595
      %v598 = vshll.u32 %v455, 16
      %v600 = vrot.slane %v598, 1
      %v601 = vsel %vm461, %v596, %v600
      %v603 = vshrl.u32 %v440, 16
      %v605 = vshll.u32 %v440, 16
      %v607 = vrot.slane %v605, 1
      %v608 = vor.u32 %v603, %v607
      %v610 = vshll.u32 %v456, 16
      %v612 = vrot.slane %v610, 1
      %v613 = vsel %vm461, %v608, %v612
      %v615 = vshrl.u32 %v441, 16
      %v617 = vshll.u32 %v441, 16
      %v619 = vrot.slane %v617, 1
      %v620 = vor.u32 %v615, %v619
      %v622 = vshll.u32 %v457, 16
      %v624 = vrot.slane %v622, 1
      %v625 = vsel %vm461, %v620, %v624
      %v627 = vshrl.u32 %v442, 16
      %v629 = vshll.u32 %v442, 16
      %v631 = vrot.slane %v629, 1
      %v632 = vor.u32 %v627, %v631
      %v634 = vshll.u32 %v458, 16
      %v636 = vrot.slane %v634, 1
      %v637 = vsel %vm461, %v632, %v636
      %v639 = vshrl.u32 %v443, 16
      %v641 = vshll.u32 %v443, 16
      %v643 = vrot.slane %v641, 1
      %v644 = vor.u32 %v639, %v643
      %v646 = vshll.u32 %v459, 16
      %v648 = vrot.slane %v646, 1
      %v649 = vsel %vm461, %v644, %v648
      %vm681 = vcmask 1046528
      %v682 = vrot.slane 0, 1
      %v683 = vsel %vm681, %v682, %v682
      %v684 = vrot.slane %v429, 1
      %v685 = vrot.slane %v445, 1
      %v686 = vsel %vm681, %v684, %v685
      %v687 = vrot.slane %v430, 1
      %v688 = vrot.slane %v446, 1
      %v689 = vsel %vm681, %v687, %v688
      %v690 = vrot.slane %v431, 1
      %v691 = vrot.slane %v447, 1
      %v692 = vsel %vm681, %v690, %v691
      %v693 = vrot.slane %v432, 1
      %v694 = vrot.slane %v448, 1
      %v695 = vsel %vm681, %v693, %v694
      %v696 = vrot.slane %v433, 1
      %v697 = vrot.slane %v449, 1
      %v698 = vsel %vm681, %v696, %v697
      %v699 = vrot.slane %v434, 1
      %v700 = vrot.slane %v450, 1
      %v701 = vsel %vm681, %v699, %v700
      %v702 = vrot.slane %v435, 1
      %v703 = vrot.slane %v451, 1
      %v704 = vsel %vm681, %v702, %v703
      %v705 = vrot.slane %v436, 1
      %v706 = vrot.slane %v452, 1
      %v707 = vsel %vm681, %v705, %v706
      %v708 = vrot.slane %v437, 1
      %v709 = vrot.slane %v453, 1
      %v710 = vsel %vm681, %v708, %v709
      %v711 = vrot.slane %v438, 1
      %v712 = vrot.slane %v454, 1
      %v713 = vsel %vm681, %v711, %v712
      %v714 = vrot.slane %v439, 1
      %v715 = vrot.slane %v455, 1
      %v716 = vsel %vm681, %v714, %v715
      %v717 = vrot.slane %v440, 1
      %v718 = vrot.slane %v456, 1
      %v719 = vsel %vm681, %v717, %v718
      %v720 = vrot.slane %v441, 1
      %v721 = vrot.slane %v457, 1
      %v722 = vsel %vm681, %v720, %v721
      %v723 = vrot.slane %v442, 1
      %v724 = vrot.slane %v458, 1
      %v725 = vsel %vm681, %v723, %v724
      %v726 = vrot.slane %v443, 1
      %v727 = vrot.slane %v459, 1
      %v728 = vsel %vm681, %v726, %v727
      %v730 = vshrl.u32 %v444, 16
      %v732 = vshll.u32 %v444, 16
      %v734 = vrot.slane %v732, 1
      %v735 = vor.u32 %v730, %v734
      %v737 = vshll.u32 %v460, 16
      %v739 = vrot.slane %v737, 1
      %v740 = vsel %vm461, %v735, %v739
      %v743 = vrot.slane %v444, 1
      %v744 = vrot.slane %v460, 1
      %v745 = vsel %vm681, %v743, %v744
      %746 = vrot.lane.b32.xlu0 %v469, 4
      %v747 = vpop.permute.xlu0 %746
      %748 = vrot.lane.b32.xlu0 %v481, 4
      %v749 = vpop.permute.xlu0 %748
      %750 = vrot.lane.b32.xlu0 %v493, 4
      %v751 = vpop.permute.xlu0 %750
      %752 = vrot.lane.b32.xlu0 %v505, 4
      %v753 = vpop.permute.xlu0 %752
      %754 = vrot.lane.b32.xlu0 %v517, 4
      %v755 = vpop.permute.xlu0 %754
      %756 = vrot.lane.b32.xlu0 %v529, 4
      %v757 = vpop.permute.xlu0 %756
      %758 = vrot.lane.b32.xlu0 %v541, 4
      %v759 = vpop.permute.xlu0 %758
      %760 = vrot.lane.b32.xlu0 %v553, 4
      %v761 = vpop.permute.xlu0 %760
      %762 = vrot.lane.b32.xlu0 %v565, 4
      %v763 = vpop.permute.xlu0 %762
      %764 = vrot.lane.b32.xlu0 %v577, 4
      %v765 = vpop.permute.xlu0 %764
      %766 = vrot.lane.b32.xlu0 %v589, 4
      %v767 = vpop.permute.xlu0 %766
      %768 = vrot.lane.b32.xlu0 %v601, 4
      %v769 = vpop.permute.xlu0 %768
      %770 = vrot.lane.b32.xlu0 %v613, 4
      %v771 = vpop.permute.xlu0 %770
      %772 = vrot.lane.b32.xlu0 %v625, 4
      %v773 = vpop.permute.xlu0 %772
      %774 = vrot.lane.b32.xlu0 %v637, 4
      %v775 = vpop.permute.xlu0 %774
      %776 = vrot.lane.b32.xlu0 %v649, 4
      %v777 = vpop.permute.xlu0 %776
      %778 = vrot.lane.b32.xlu0 %v683, 8
      %v779 = vpop.permute.xlu0 %778
      %780 = vrot.lane.b32.xlu0 %v686, 8
      %v781 = vpop.permute.xlu0 %780
      %782 = vrot.lane.b32.xlu0 %v689, 8
      %v783 = vpop.permute.xlu0 %782
      %784 = vrot.lane.b32.xlu0 %v692, 8
      %v785 = vpop.permute.xlu0 %784
      %786 = vrot.lane.b32.xlu0 %v695, 8
      %v787 = vpop.permute.xlu0 %786
      %788 = vrot.lane.b32.xlu0 %v698, 8
      %v789 = vpop.permute.xlu0 %788
      %790 = vrot.lane.b32.xlu0 %v701, 8
      %v791 = vpop.permute.xlu0 %790
      %792 = vrot.lane.b32.xlu0 %v704, 8
      %v793 = vpop.permute.xlu0 %792
      %794 = vrot.lane.b32.xlu0 %v707, 8
      %v795 = vpop.permute.xlu0 %794
      %796 = vrot.lane.b32.xlu0 %v710, 8
      %v797 = vpop.permute.xlu0 %796
      %798 = vrot.lane.b32.xlu0 %v713, 8
      %v799 = vpop.permute.xlu0 %798
      %800 = vrot.lane.b32.xlu0 %v716, 8
      %v801 = vpop.permute.xlu0 %800
      %802 = vrot.lane.b32.xlu0 %v719, 8
      %v803 = vpop.permute.xlu0 %802
      %804 = vrot.lane.b32.xlu0 %v722, 8
      %v805 = vpop.permute.xlu0 %804
      %806 = vrot.lane.b32.xlu0 %v725, 8
      %v807 = vpop.permute.xlu0 %806
      %808 = vrot.lane.b32.xlu0 %v728, 8
      %v809 = vpop.permute.xlu0 %808
      %810 = vrot.lane.b32.xlu0 %v429, 12
      %v811 = vpop.permute.xlu0 %810
      %812 = vrot.lane.b32.xlu0 %v430, 12
      %v813 = vpop.permute.xlu0 %812
      %814 = vrot.lane.b32.xlu0 %v431, 12
      %v815 = vpop.permute.xlu0 %814
      %816 = vrot.lane.b32.xlu0 %v432, 12
      %v817 = vpop.permute.xlu0 %816
      %818 = vrot.lane.b32.xlu0 %v433, 12
      %v819 = vpop.permute.xlu0 %818
      %820 = vrot.lane.b32.xlu0 %v434, 12
      %v821 = vpop.permute.xlu0 %820
      %822 = vrot.lane.b32.xlu0 %v435, 12
      %v823 = vpop.permute.xlu0 %822
      %824 = vrot.lane.b32.xlu0 %v436, 12
      %v825 = vpop.permute.xlu0 %824
      %826 = vrot.lane.b32.xlu0 %v437, 12
      %v827 = vpop.permute.xlu0 %826
      %828 = vrot.lane.b32.xlu0 %v438, 12
      %v829 = vpop.permute.xlu0 %828
      %830 = vrot.lane.b32.xlu0 %v439, 12
      %v831 = vpop.permute.xlu0 %830
      %832 = vrot.lane.b32.xlu0 %v440, 12
      %v833 = vpop.permute.xlu0 %832
      %834 = vrot.lane.b32.xlu0 %v441, 12
      %v835 = vpop.permute.xlu0 %834
      %836 = vrot.lane.b32.xlu0 %v442, 12
      %v837 = vpop.permute.xlu0 %836
      %838 = vrot.lane.b32.xlu0 %v443, 12
      %v839 = vpop.permute.xlu0 %838
      %840 = vrot.lane.b32.xlu0 %v444, 12
      %v841 = vpop.permute.xlu0 %840
      %842 = vrot.lane.b32.xlu0 %v481, 16
      %v843 = vpop.permute.xlu0 %842
      %844 = vrot.lane.b32.xlu0 %v493, 16
      %v845 = vpop.permute.xlu0 %844
      %846 = vrot.lane.b32.xlu0 %v505, 16
      %v847 = vpop.permute.xlu0 %846
      %848 = vrot.lane.b32.xlu0 %v517, 16
      %v849 = vpop.permute.xlu0 %848
      %850 = vrot.lane.b32.xlu0 %v529, 16
      %v851 = vpop.permute.xlu0 %850
      %852 = vrot.lane.b32.xlu0 %v541, 16
      %v853 = vpop.permute.xlu0 %852
      %854 = vrot.lane.b32.xlu0 %v553, 16
      %v855 = vpop.permute.xlu0 %854
      %856 = vrot.lane.b32.xlu0 %v565, 16
      %v857 = vpop.permute.xlu0 %856
      %858 = vrot.lane.b32.xlu0 %v577, 16
      %v859 = vpop.permute.xlu0 %858
      %860 = vrot.lane.b32.xlu0 %v589, 16
      %v861 = vpop.permute.xlu0 %860
      %862 = vrot.lane.b32.xlu0 %v601, 16
      %v863 = vpop.permute.xlu0 %862
      %864 = vrot.lane.b32.xlu0 %v613, 16
      %v865 = vpop.permute.xlu0 %864
      %866 = vrot.lane.b32.xlu0 %v625, 16
      %v867 = vpop.permute.xlu0 %866
      %868 = vrot.lane.b32.xlu0 %v637, 16
      %v869 = vpop.permute.xlu0 %868
      %870 = vrot.lane.b32.xlu0 %v649, 16
      %v871 = vpop.permute.xlu0 %870
      %872 = vrot.lane.b32.xlu0 %v740, 16
      %v873 = vpop.permute.xlu0 %872
      %874 = vrot.lane.b32.xlu0 %v686, 20
      %v875 = vpop.permute.xlu0 %874
      %876 = vrot.lane.b32.xlu0 %v689, 20
      %v877 = vpop.permute.xlu0 %876
      %878 = vrot.lane.b32.xlu0 %v692, 20
      %v879 = vpop.permute.xlu0 %878
      %880 = vrot.lane.b32.xlu0 %v695, 20
      %v881 = vpop.permute.xlu0 %880
      %882 = vrot.lane.b32.xlu0 %v698, 20
      %v883 = vpop.permute.xlu0 %882
      %884 = vrot.lane.b32.xlu0 %v701, 20
      %v885 = vpop.permute.xlu0 %884
      %886 = vrot.lane.b32.xlu0 %v704, 20
      %v887 = vpop.permute.xlu0 %886
      %888 = vrot.lane.b32.xlu0 %v707, 20
      %v889 = vpop.permute.xlu0 %888
      %890 = vrot.lane.b32.xlu0 %v710, 20
      %v891 = vpop.permute.xlu0 %890
      %892 = vrot.lane.b32.xlu0 %v713, 20
      %v893 = vpop.permute.xlu0 %892
      %894 = vrot.lane.b32.xlu0 %v716, 20
      %v895 = vpop.permute.xlu0 %894
      %896 = vrot.lane.b32.xlu0 %v719, 20
      %v897 = vpop.permute.xlu0 %896
      %898 = vrot.lane.b32.xlu0 %v722, 20
      %v899 = vpop.permute.xlu0 %898
      %900 = vrot.lane.b32.xlu0 %v725, 20
      %v901 = vpop.permute.xlu0 %900
      %902 = vrot.lane.b32.xlu0 %v728, 20
      %v903 = vpop.permute.xlu0 %902
      %904 = vrot.lane.b32.xlu0 %v745, 20
      %v905 = vpop.permute.xlu0 %904
      %906 = vrot.lane.b32.xlu0 %v430, 24
      %v907 = vpop.permute.xlu0 %906
      %908 = vrot.lane.b32.xlu0 %v431, 24
      %v909 = vpop.permute.xlu0 %908
      %910 = vrot.lane.b32.xlu0 %v432, 24
      %v911 = vpop.permute.xlu0 %910
      %912 = vrot.lane.b32.xlu0 %v433, 24
      %v913 = vpop.permute.xlu0 %912
      %914 = vrot.lane.b32.xlu0 %v434, 24
      %v915 = vpop.permute.xlu0 %914
      %916 = vrot.lane.b32.xlu0 %v435, 24
      %v917 = vpop.permute.xlu0 %916
      %918 = vrot.lane.b32.xlu0 %v436, 24
      %v919 = vpop.permute.xlu0 %918
      %920 = vrot.lane.b32.xlu0 %v437, 24
      %v921 = vpop.permute.xlu0 %920
      %922 = vrot.lane.b32.xlu0 %v438, 24
      %v923 = vpop.permute.xlu0 %922
      %924 = vrot.lane.b32.xlu0 %v439, 24
      %v925 = vpop.permute.xlu0 %924
      %926 = vrot.lane.b32.xlu0 %v440, 24
      %v927 = vpop.permute.xlu0 %926
      %928 = vrot.lane.b32.xlu0 %v441, 24
      %v929 = vpop.permute.xlu0 %928
      %930 = vrot.lane.b32.xlu0 %v442, 24
      %v931 = vpop.permute.xlu0 %930
      %932 = vrot.lane.b32.xlu0 %v443, 24
      %v933 = vpop.permute.xlu0 %932
      %934 = vrot.lane.b32.xlu0 %v444, 24
      %v935 = vpop.permute.xlu0 %934
      %936 = vrot.lane.b32.xlu0 0, 24
      %v937 = vpop.permute.xlu0 %936
      %938 = vrot.lane.b32.xlu0 %v493, 28
      %v939 = vpop.permute.xlu0 %938
      %940 = vrot.lane.b32.xlu0 %v505, 28
      %v941 = vpop.permute.xlu0 %940
      %942 = vrot.lane.b32.xlu0 %v517, 28
      %v943 = vpop.permute.xlu0 %942
      %944 = vrot.lane.b32.xlu0 %v529, 28
      %v945 = vpop.permute.xlu0 %944
      %946 = vrot.lane.b32.xlu0 %v541, 28
      %v947 = vpop.permute.xlu0 %946
      %948 = vrot.lane.b32.xlu0 %v553, 28
      %v949 = vpop.permute.xlu0 %948
      %950 = vrot.lane.b32.xlu0 %v565, 28
      %v951 = vpop.permute.xlu0 %950
      %952 = vrot.lane.b32.xlu0 %v577, 28
      %v953 = vpop.permute.xlu0 %952
      %954 = vrot.lane.b32.xlu0 %v589, 28
      %v955 = vpop.permute.xlu0 %954
      %956 = vrot.lane.b32.xlu0 %v601, 28
      %v957 = vpop.permute.xlu0 %956
      %958 = vrot.lane.b32.xlu0 %v613, 28
      %v959 = vpop.permute.xlu0 %958
      %960 = vrot.lane.b32.xlu0 %v625, 28
      %v961 = vpop.permute.xlu0 %960
      %962 = vrot.lane.b32.xlu0 %v637, 28
      %v963 = vpop.permute.xlu0 %962
      %964 = vrot.lane.b32.xlu0 %v649, 28
      %v965 = vpop.permute.xlu0 %964
      %966 = vrot.lane.b32.xlu0 %v740, 28
      %v967 = vpop.permute.xlu0 %966
      %968 = vrot.lane.b32.xlu0 %v469, 28
      %v969 = vpop.permute.xlu0 %968
      %970 = vrot.lane.b32.xlu0 %v689, 32
      %v971 = vpop.permute.xlu0 %970
      %972 = vrot.lane.b32.xlu0 %v692, 32
      %v973 = vpop.permute.xlu0 %972
      %974 = vrot.lane.b32.xlu0 %v695, 32
      %v975 = vpop.permute.xlu0 %974
      %976 = vrot.lane.b32.xlu0 %v698, 32
      %v977 = vpop.permute.xlu0 %976
      %978 = vrot.lane.b32.xlu0 %v701, 32
      %v979 = vpop.permute.xlu0 %978
      %980 = vrot.lane.b32.xlu0 %v704, 32
      %v981 = vpop.permute.xlu0 %980
      %982 = vrot.lane.b32.xlu0 %v707, 32
      %v983 = vpop.permute.xlu0 %982
      %984 = vrot.lane.b32.xlu0 %v710, 32
      %v985 = vpop.permute.xlu0 %984
      %986 = vrot.lane.b32.xlu0 %v713, 32
      %v987 = vpop.permute.xlu0 %986
      %988 = vrot.lane.b32.xlu0 %v716, 32
      %v989 = vpop.permute.xlu0 %988
      %990 = vrot.lane.b32.xlu0 %v719, 32
      %v991 = vpop.permute.xlu0 %990
      %992 = vrot.lane.b32.xlu0 %v722, 32
      %v993 = vpop.permute.xlu0 %992
      %994 = vrot.lane.b32.xlu0 %v725, 32
      %v995 = vpop.permute.xlu0 %994
      %996 = vrot.lane.b32.xlu0 %v728, 32
      %v997 = vpop.permute.xlu0 %996
      %998 = vrot.lane.b32.xlu0 %v745, 32
      %v999 = vpop.permute.xlu0 %998
      %1000 = vrot.lane.b32.xlu0 %v683, 32
      %v1001 = vpop.permute.xlu0 %1000
      %vm1002 = vcmask 31744
      %v1004 = vsel %vm1002, 0, %v747
      %v1006 = vsel %vm1002, %v429, %v749
      %v1008 = vsel %vm1002, %v430, %v751
      %v1010 = vsel %vm1002, %v431, %v753
      %v1012 = vsel %vm1002, %v432, %v755
      %v1014 = vsel %vm1002, %v433, %v757
      %v1016 = vsel %vm1002, %v434, %v759
      %v1018 = vsel %vm1002, %v435, %v761
      %v1020 = vsel %vm1002, %v436, %v763
      %v1022 = vsel %vm1002, %v437, %v765
      %v1024 = vsel %vm1002, %v438, %v767
      %v1026 = vsel %vm1002, %v439, %v769
      %v1028 = vsel %vm1002, %v440, %v771
      %v1030 = vsel %vm1002, %v441, %v773
      %v1032 = vsel %vm1002, %v442, %v775
      %v1034 = vsel %vm1002, %v443, %v777
      %vm1035 = vcmask 64512
      %v1037 = vsel %vm1035, %v1004, %v779
      %v1039 = vsel %vm1035, %v1006, %v781
      %v1041 = vsel %vm1035, %v1008, %v783
      %v1043 = vsel %vm1035, %v1010, %v785
      %v1045 = vsel %vm1035, %v1012, %v787
      %v1047 = vsel %vm1035, %v1014, %v789
      %v1049 = vsel %vm1035, %v1016, %v791
      %v1051 = vsel %vm1035, %v1018, %v793
      %v1053 = vsel %vm1035, %v1020, %v795
      %v1055 = vsel %vm1035, %v1022, %v797
      %v1057 = vsel %vm1035, %v1024, %v799
      %v1059 = vsel %vm1035, %v1026, %v801
      %v1061 = vsel %vm1035, %v1028, %v803
      %v1063 = vsel %vm1035, %v1030, %v805
      %v1065 = vsel %vm1035, %v1032, %v807
      %v1067 = vsel %vm1035, %v1034, %v809
      %vm1068 = vcmask 97280
      %v1070 = vsel %vm1068, %v1037, %v811
      %v1072 = vsel %vm1068, %v1039, %v813
      %v1074 = vsel %vm1068, %v1041, %v815
      %v1076 = vsel %vm1068, %v1043, %v817
      %v1078 = vsel %vm1068, %v1045, %v819
      %v1080 = vsel %vm1068, %v1047, %v821
      %v1082 = vsel %vm1068, %v1049, %v823
      %v1084 = vsel %vm1068, %v1051, %v825
      %v1086 = vsel %vm1068, %v1053, %v827
      %v1088 = vsel %vm1068, %v1055, %v829
      %v1090 = vsel %vm1068, %v1057, %v831
      %v1092 = vsel %vm1068, %v1059, %v833
      %v1094 = vsel %vm1068, %v1061, %v835
      %v1096 = vsel %vm1068, %v1063, %v837
      %v1098 = vsel %vm1068, %v1065, %v839
      %v1100 = vsel %vm1068, %v1067, %v841
      %vm1101 = vcmask 130048
      %v1103 = vsel %vm1101, %v1070, %v843
      %v1105 = vsel %vm1101, %v1072, %v845
      %v1107 = vsel %vm1101, %v1074, %v847
      %v1109 = vsel %vm1101, %v1076, %v849
      %v1111 = vsel %vm1101, %v1078, %v851
      %v1113 = vsel %vm1101, %v1080, %v853
      %v1115 = vsel %vm1101, %v1082, %v855
      %v1117 = vsel %vm1101, %v1084, %v857
      %v1119 = vsel %vm1101, %v1086, %v859
      %v1121 = vsel %vm1101, %v1088, %v861
      %v1123 = vsel %vm1101, %v1090, %v863
      %v1125 = vsel %vm1101, %v1092, %v865
      %v1127 = vsel %vm1101, %v1094, %v867
      %v1129 = vsel %vm1101, %v1096, %v869
      %v1131 = vsel %vm1101, %v1098, %v871
      %v1133 = vsel %vm1101, %v1100, %v873
      %vm1134 = vcmask 162816
      %v1136 = vsel %vm1134, %v1103, %v875
      %v1138 = vsel %vm1134, %v1105, %v877
      %v1140 = vsel %vm1134, %v1107, %v879
      %v1142 = vsel %vm1134, %v1109, %v881
      %v1144 = vsel %vm1134, %v1111, %v883
      %v1146 = vsel %vm1134, %v1113, %v885
      %v1148 = vsel %vm1134, %v1115, %v887
      %v1150 = vsel %vm1134, %v1117, %v889
      %v1152 = vsel %vm1134, %v1119, %v891
      %v1154 = vsel %vm1134, %v1121, %v893
      %v1156 = vsel %vm1134, %v1123, %v895
      %v1158 = vsel %vm1134, %v1125, %v897
      %v1160 = vsel %vm1134, %v1127, %v899
      %v1162 = vsel %vm1134, %v1129, %v901
      %v1164 = vsel %vm1134, %v1131, %v903
      %v1166 = vsel %vm1134, %v1133, %v905
      %vm1167 = vcmask 195584
      %v1169 = vsel %vm1167, %v1136, %v907
      %v1171 = vsel %vm1167, %v1138, %v909
      %v1173 = vsel %vm1167, %v1140, %v911
      %v1175 = vsel %vm1167, %v1142, %v913
      %v1177 = vsel %vm1167, %v1144, %v915
      %v1179 = vsel %vm1167, %v1146, %v917
      %v1181 = vsel %vm1167, %v1148, %v919
      %v1183 = vsel %vm1167, %v1150, %v921
      %v1185 = vsel %vm1167, %v1152, %v923
      %v1187 = vsel %vm1167, %v1154, %v925
      %v1189 = vsel %vm1167, %v1156, %v927
      %v1191 = vsel %vm1167, %v1158, %v929
      %v1193 = vsel %vm1167, %v1160, %v931
      %v1195 = vsel %vm1167, %v1162, %v933
      %v1197 = vsel %vm1167, %v1164, %v935
      %v1199 = vsel %vm1167, %v1166, %v937
      %vm1200 = vcmask 228352
      %v1202 = vsel %vm1200, %v1169, %v939
      %v1204 = vsel %vm1200, %v1171, %v941
      %v1206 = vsel %vm1200, %v1173, %v943
      %v1208 = vsel %vm1200, %v1175, %v945
      %v1210 = vsel %vm1200, %v1177, %v947
      %v1212 = vsel %vm1200, %v1179, %v949
      %v1214 = vsel %vm1200, %v1181, %v951
      %v1216 = vsel %vm1200, %v1183, %v953
      %v1218 = vsel %vm1200, %v1185, %v955
      %v1220 = vsel %vm1200, %v1187, %v957
      %v1222 = vsel %vm1200, %v1189, %v959
      %v1224 = vsel %vm1200, %v1191, %v961
      %v1226 = vsel %vm1200, %v1193, %v963
      %v1228 = vsel %vm1200, %v1195, %v965
      %v1230 = vsel %vm1200, %v1197, %v967
      %v1232 = vsel %vm1200, %v1199, %v969
      %vm1233 = vcmask 261120
      %v1235 = vsel %vm1233, %v1202, %v971
      %v1237 = vsel %vm1233, %v1204, %v973
      %v1239 = vsel %vm1233, %v1206, %v975
      %v1241 = vsel %vm1233, %v1208, %v977
      %v1243 = vsel %vm1233, %v1210, %v979
      %v1245 = vsel %vm1233, %v1212, %v981
      %v1247 = vsel %vm1233, %v1214, %v983
      %v1249 = vsel %vm1233, %v1216, %v985
      %v1251 = vsel %vm1233, %v1218, %v987
      %v1253 = vsel %vm1233, %v1220, %v989
      %v1255 = vsel %vm1233, %v1222, %v991
      %v1257 = vsel %vm1233, %v1224, %v993
      %v1259 = vsel %vm1233, %v1226, %v995
      %v1261 = vsel %vm1233, %v1228, %v997
      %v1263 = vsel %vm1233, %v1230, %v999
      %v1265 = vsel %vm1233, %v1232, %v1001
      %v1266 = vld [vmem:[%s1] sm:$0xf]
      %v1267 = vld [vmem:[%s1 + $0x4] sm:$0xf]
      %v1268 = vld [vmem:[%s1 + $0x8] sm:$0xf]
      %v1269 = vld [vmem:[%s1 + $0xc] sm:$0xf]
      %v1270 = vld [vmem:[%s1 + $0x10] sm:$0x3]
      %v1271 = vld [vmem:[%s2] sm:$0x1]
      %v1273 = vlaneseq
      %v1274 = vshrl.u32 %v1273, 7
      %v1275 = vsub.s32 0, %v1274
      %v1276 = vrot.slane %v1271, %v1275
      %v1283 = vunpack.c.l.b16 %v1266
      %v1284 = vunpack.c.l.b16 %v1267
      %v1285 = vunpack.c.l.b16 %v1268
      %v1286 = vunpack.c.l.b16 %v1269
      %v1287 = vunpack.c.l.b16 %v1270
      %v1288 = vpack.c.b16 %v1284, %v1283
      %v1289 = vpack.c.b16 %v1286, %v1285
      %v1290 = vpack.c.b16 %v1287, %v1287
      %vm1293 = vcmask 293888
      %v1294 = vsel %vm1293, %v1235, 0
      %v1296 = vsel %vm1293, %v1237, 0
      %v1298 = vsel %vm1293, %v1239, 0
      %v1300 = vsel %vm1293, %v1241, 0
      %v1302 = vsel %vm1293, %v1243, 0
      %v1304 = vsel %vm1293, %v1245, 0
      %v1306 = vsel %vm1293, %v1247, 0
      %v1308 = vsel %vm1293, %v1249, 0
      %v1310 = vsel %vm1293, %v1251, 0
      %v1312 = vsel %vm1293, %v1253, 0
      %v1314 = vsel %vm1293, %v1255, 0
      %v1316 = vsel %vm1293, %v1257, 0
      %v1318 = vsel %vm1293, %v1259, 0
      %v1320 = vsel %vm1293, %v1261, 0
      %v1322 = vsel %vm1293, %v1263, 0
      %v1324 = vsel %vm1293, %v1265, 0
      %vm1326 = vcmask 1041408
      %v1328 = vsel %vm1326, %v1290, 0
      %1330 = vmatprep.subr.bf16.mxu0 0
      %1331 = vmatpush1.bf16.msra.mxu0 %v1288
      %1332 = vmatprep.subr.bf16.mxu0 0
      %1333 = vmatpush1.bf16.msra.mxu0 %v1289
      %1334 = vmatprep.subr.bf16.mxu0 0
      %1335 = vmatpush1.bf16.msra.mxu0 %v1328
      %1336 = vmatprep.subr.bf16.mxu0 0
      %1337 = vmatpush1.bf16.msra.mxu0 0
      %1338 = vmatprep.subr.bf16.mxu0 0
      %1339 = vmatpush1.bf16.msra.mxu0 0
      %1340 = vmatprep.subr.bf16.mxu0 0
      %1341 = vmatpush1.bf16.msra.mxu0 0
      %1342 = vmatprep.subr.bf16.mxu0 0
      %1343 = vmatpush1.bf16.msra.mxu0 0
      %1344 = vmatprep.subr.bf16.mxu0 0
      %1345 = vmatpush1.bf16.msra.mxu0 0
      %1346 = vmatprep.subr.bf16.mxu0 0
      %1347 = vmatpush1.bf16.msra.mxu0 0
      %1348 = vmatprep.subr.bf16.mxu0 0
      %1349 = vmatpush1.bf16.msra.mxu0 0
      %1350 = vmatprep.subr.bf16.mxu0 0
      %1351 = vmatpush1.bf16.msra.mxu0 0
      %1352 = vmatprep.subr.bf16.mxu0 0
      %1353 = vmatpush1.bf16.msra.mxu0 0
      %1354 = vmatprep.subr.bf16.mxu0 0
      %1355 = vmatpush1.bf16.msra.mxu0 0
      %1356 = vmatprep.subr.bf16.mxu0 0
      %1357 = vmatpush1.bf16.msra.mxu0 0
      %1358 = vmatprep.subr.bf16.mxu0 0
      %1359 = vmatpush1.bf16.msra.mxu0 0
      %1360 = vmatprep.subr.bf16.mxu0 0
      %1361 = vmatpush1.bf16.msra.mxu0 0
      %1362 = vmatprep.mubr.bf16.mxu0 0
      %1363 = vmatmul.mubr.bf16.gmra.mrb[0].mxu0 %v1294
      %v1364 = vpop.f32.mrb[0].mxu0
      %v1365 = vadd.f32 %v1276, %v1364
      %v1366 = vpop.f32.mrb[0].mxu0
      %v1367 = vpop.f32.mrb[0].mxu0
      %v1368 = vadd.f32 %v1276, %v1367
      %v1369 = vpop.f32.mrb[0].mxu0
      %1370 = vmatprep.mubr.bf16.mxu0 0
      %1371 = vmatmul.mubr.bf16.gmra.mrb[0].mxu0 %v1296
      %v1372 = vpop.f32.mrb[0].mxu0
      %v1373 = vadd.f32 %v1276, %v1372
      %v1374 = vpop.f32.mrb[0].mxu0
      %v1375 = vpop.f32.mrb[0].mxu0
      %v1376 = vadd.f32 %v1276, %v1375
      %v1377 = vpop.f32.mrb[0].mxu0
      %1378 = vmatprep.mubr.bf16.mxu0 0
      %1379 = vmatmul.mubr.bf16.gmra.mrb[0].mxu0 %v1298
      %v1380 = vpop.f32.mrb[0].mxu0
      %v1381 = vadd.f32 %v1276, %v1380
      %v1382 = vpop.f32.mrb[0].mxu0
      %v1383 = vpop.f32.mrb[0].mxu0
      %v1384 = vadd.f32 %v1276, %v1383
      %v1385 = vpop.f32.mrb[0].mxu0
      %1386 = vmatprep.mubr.bf16.mxu0 0
      %1387 = vmatmul.mubr.bf16.gmra.mrb[0].mxu0 %v1300
      %v1388 = vpop.f32.mrb[0].mxu0
      %v1389 = vadd.f32 %v1276, %v1388
      %v1390 = vpop.f32.mrb[0].mxu0
      %v1391 = vpop.f32.mrb[0].mxu0
      %v1392 = vadd.f32 %v1276, %v1391
      %v1393 = vpop.f32.mrb[0].mxu0
      %1394 = vmatprep.mubr.bf16.mxu0 0
      %1395 = vmatmul.mubr.bf16.gmra.mrb[0].mxu0 %v1302
      %v1396 = vpop.f32.mrb[0].mxu0
      %v1397 = vadd.f32 %v1276, %v1396
      %v1398 = vpop.f32.mrb[0].mxu0
      %v1399 = vpop.f32.mrb[0].mxu0
      %v1400 = vadd.f32 %v1276, %v1399
      %v1401 = vpop.f32.mrb[0].mxu0
      %1402 = vmatprep.mubr.bf16.mxu0 0
      %1403 = vmatmul.mubr.bf16.gmra.mrb[0].mxu0 %v1304
      %v1404 = vpop.f32.mrb[0].mxu0
      %v1405 = vadd.f32 %v1276, %v1404
      %v1406 = vpop.f32.mrb[0].mxu0
      %v1407 = vpop.f32.mrb[0].mxu0
      %v1408 = vadd.f32 %v1276, %v1407
      %v1409 = vpop.f32.mrb[0].mxu0
      %1410 = vmatprep.mubr.bf16.mxu0 0
      %1411 = vmatmul.mubr.bf16.gmra.mrb[0].mxu0 %v1306
      %v1412 = vpop.f32.mrb[0].mxu0
      %v1413 = vadd.f32 %v1276, %v1412
      %v1414 = vpop.f32.mrb[0].mxu0
      %v1415 = vpop.f32.mrb[0].mxu0
      %v1416 = vadd.f32 %v1276, %v1415
      %v1417 = vpop.f32.mrb[0].mxu0
      %1418 = vmatprep.mubr.bf16.mxu0 0
      %1419 = vmatmul.mubr.bf16.gmra.mrb[0].mxu0 %v1308
      %v1420 = vpop.f32.mrb[0].mxu0
      %v1421 = vadd.f32 %v1276, %v1420
      %v1422 = vpop.f32.mrb[0].mxu0
      %v1423 = vpop.f32.mrb[0].mxu0
      %v1424 = vadd.f32 %v1276, %v1423
      %v1425 = vpop.f32.mrb[0].mxu0
      %1426 = vmatprep.mubr.bf16.mxu0 0
      %1427 = vmatmul.mubr.bf16.gmra.mrb[0].mxu0 %v1310
      %v1428 = vpop.f32.mrb[0].mxu0
      %v1429 = vadd.f32 %v1276, %v1428
      %v1430 = vpop.f32.mrb[0].mxu0
      %v1431 = vpop.f32.mrb[0].mxu0
      %v1432 = vadd.f32 %v1276, %v1431
      %v1433 = vpop.f32.mrb[0].mxu0
      %1434 = vmatprep.mubr.bf16.mxu0 0
      %1435 = vmatmul.mubr.bf16.gmra.mrb[0].mxu0 %v1312
      %v1436 = vpop.f32.mrb[0].mxu0
      %v1437 = vadd.f32 %v1276, %v1436
      %v1438 = vpop.f32.mrb[0].mxu0
      %v1439 = vpop.f32.mrb[0].mxu0
      %v1440 = vadd.f32 %v1276, %v1439
      %v1441 = vpop.f32.mrb[0].mxu0
      %1442 = vmatprep.mubr.bf16.mxu0 0
      %1443 = vmatmul.mubr.bf16.gmra.mrb[0].mxu0 %v1314
      %v1444 = vpop.f32.mrb[0].mxu0
      %v1445 = vadd.f32 %v1276, %v1444
      %v1446 = vpop.f32.mrb[0].mxu0
      %v1447 = vpop.f32.mrb[0].mxu0
      %v1448 = vadd.f32 %v1276, %v1447
      %v1449 = vpop.f32.mrb[0].mxu0
      %1450 = vmatprep.mubr.bf16.mxu0 0
      %1451 = vmatmul.mubr.bf16.gmra.mrb[0].mxu0 %v1316
      %v1452 = vpop.f32.mrb[0].mxu0
      %v1453 = vadd.f32 %v1276, %v1452
      %v1454 = vpop.f32.mrb[0].mxu0
      %v1455 = vpop.f32.mrb[0].mxu0
      %v1456 = vadd.f32 %v1276, %v1455
      %v1457 = vpop.f32.mrb[0].mxu0
      %1458 = vmatprep.mubr.bf16.mxu0 0
      %1459 = vmatmul.mubr.bf16.gmra.mrb[0].mxu0 %v1318
      %v1460 = vpop.f32.mrb[0].mxu0
      %v1461 = vadd.f32 %v1276, %v1460
      %v1462 = vpop.f32.mrb[0].mxu0
      %v1463 = vpop.f32.mrb[0].mxu0
      %v1464 = vadd.f32 %v1276, %v1463
      %v1465 = vpop.f32.mrb[0].mxu0
      %1466 = vmatprep.mubr.bf16.mxu0 0
      %1467 = vmatmul.mubr.bf16.gmra.mrb[0].mxu0 %v1320
      %v1468 = vpop.f32.mrb[0].mxu0
      %v1469 = vadd.f32 %v1276, %v1468
      %v1470 = vpop.f32.mrb[0].mxu0
      %v1471 = vpop.f32.mrb[0].mxu0
      %v1472 = vadd.f32 %v1276, %v1471
      %v1473 = vpop.f32.mrb[0].mxu0
      %1474 = vmatprep.mubr.bf16.mxu0 0
      %1475 = vmatmul.mubr.bf16.gmra.mrb[0].mxu0 %v1322
      %v1476 = vpop.f32.mrb[0].mxu0
      %v1477 = vadd.f32 %v1276, %v1476
      %v1478 = vpop.f32.mrb[0].mxu0
      %v1479 = vpop.f32.mrb[0].mxu0
      %v1480 = vadd.f32 %v1276, %v1479
      %v1481 = vpop.f32.mrb[0].mxu0
      %1482 = vmatprep.mubr.bf16.mxu0 0
      %1483 = vmatmul.mubr.bf16.gmra.mrb[0].mxu0 %v1324
      %v1484 = vpop.f32.mrb[0].mxu0
      %v1485 = vadd.f32 %v1276, %v1484
      %v1486 = vpop.f32.mrb[0].mxu0
      %v1487 = vpop.f32.mrb[0].mxu0
      %v1488 = vadd.f32 %v1276, %v1487
      %v1489 = vpop.f32.mrb[0].mxu0
      %1490 = vdwg.mxu0
      %vm1491 = vcmp.ge.f32.partialorder %v1365, 0.0
      %vm1492 = vcmp.ge.f32.partialorder %v1368, 0.0
      %vm1493 = vcmp.ge.f32.partialorder %v1373, 0.0
      %vm1494 = vcmp.ge.f32.partialorder %v1376, 0.0
      %vm1495 = vcmp.ge.f32.partialorder %v1381, 0.0
      %vm1496 = vcmp.ge.f32.partialorder %v1384, 0.0
      %vm1497 = vcmp.ge.f32.partialorder %v1389, 0.0
      %vm1498 = vcmp.ge.f32.partialorder %v1392, 0.0
      %vm1499 = vcmp.ge.f32.partialorder %v1397, 0.0
      %vm1500 = vcmp.ge.f32.partialorder %v1400, 0.0
      %vm1501 = vcmp.ge.f32.partialorder %v1405, 0.0
      %vm1502 = vcmp.ge.f32.partialorder %v1408, 0.0
      %vm1503 = vcmp.ge.f32.partialorder %v1413, 0.0
      %vm1504 = vcmp.ge.f32.partialorder %v1416, 0.0
      %vm1505 = vcmp.ge.f32.partialorder %v1421, 0.0
      %vm1506 = vcmp.ge.f32.partialorder %v1424, 0.0
      %vm1507 = vcmp.ge.f32.partialorder %v1429, 0.0
      %vm1508 = vcmp.ge.f32.partialorder %v1432, 0.0
      %vm1509 = vcmp.ge.f32.partialorder %v1437, 0.0
      %vm1510 = vcmp.ge.f32.partialorder %v1440, 0.0
      %vm1511 = vcmp.ge.f32.partialorder %v1445, 0.0
      %vm1512 = vcmp.ge.f32.partialorder %v1448, 0.0
      %vm1513 = vcmp.ge.f32.partialorder %v1453, 0.0
      %vm1514 = vcmp.ge.f32.partialorder %v1456, 0.0
      %vm1515 = vcmp.ge.f32.partialorder %v1461, 0.0
      %vm1516 = vcmp.ge.f32.partialorder %v1464, 0.0
      %vm1517 = vcmp.ge.f32.partialorder %v1469, 0.0
      %vm1518 = vcmp.ge.f32.partialorder %v1472, 0.0
      %vm1519 = vcmp.ge.f32.partialorder %v1477, 0.0
      %vm1520 = vcmp.ge.f32.partialorder %v1480, 0.0
      %vm1521 = vcmp.ge.f32.partialorder %v1485, 0.0
      %vm1522 = vcmp.ge.f32.partialorder %v1488, 0.0
      %v1523 = vmul.f32 %v1365, 0.1
      %v1524 = vmul.f32 %v1368, 0.1
      %v1525 = vmul.f32 %v1373, 0.1
      %v1526 = vmul.f32 %v1376, 0.1
      %v1527 = vmul.f32 %v1381, 0.1
      %v1528 = vmul.f32 %v1384, 0.1
      %v1529 = vmul.f32 %v1389, 0.1
      %v1530 = vmul.f32 %v1392, 0.1
      %v1531 = vmul.f32 %v1397, 0.1
      %v1532 = vmul.f32 %v1400, 0.1
      %v1533 = vmul.f32 %v1405, 0.1
      %v1534 = vmul.f32 %v1408, 0.1
      %v1535 = vmul.f32 %v1413, 0.1
      %v1536 = vmul.f32 %v1416, 0.1
      %v1537 = vmul.f32 %v1421, 0.1
      %v1538 = vmul.f32 %v1424, 0.1
      %v1539 = vmul.f32 %v1429, 0.1
      %v1540 = vmul.f32 %v1432, 0.1
      %v1541 = vmul.f32 %v1437, 0.1
      %v1542 = vmul.f32 %v1440, 0.1
      %v1543 = vmul.f32 %v1445, 0.1
      %v1544 = vmul.f32 %v1448, 0.1
      %v1545 = vmul.f32 %v1453, 0.1
      %v1546 = vmul.f32 %v1456, 0.1
      %v1547 = vmul.f32 %v1461, 0.1
      %v1548 = vmul.f32 %v1464, 0.1
      %v1549 = vmul.f32 %v1469, 0.1
      %v1550 = vmul.f32 %v1472, 0.1
      %v1551 = vmul.f32 %v1477, 0.1
      %v1552 = vmul.f32 %v1480, 0.1
      %v1553 = vmul.f32 %v1485, 0.1
      %v1554 = vmul.f32 %v1488, 0.1
      %v1555 = vsel %vm1491, %v1365, %v1523
      %v1556 = vsel %vm1492, %v1368, %v1524
      %v1557 = vsel %vm1493, %v1373, %v1525
      %v1558 = vsel %vm1494, %v1376, %v1526
      %v1559 = vsel %vm1495, %v1381, %v1527
      %v1560 = vsel %vm1496, %v1384, %v1528
      %v1561 = vsel %vm1497, %v1389, %v1529
      %v1562 = vsel %vm1498, %v1392, %v1530
      %v1563 = vsel %vm1499, %v1397, %v1531
      %v1564 = vsel %vm1500, %v1400, %v1532
      %v1565 = vsel %vm1501, %v1405, %v1533
      %v1566 = vsel %vm1502, %v1408, %v1534
      %v1567 = vsel %vm1503, %v1413, %v1535
      %v1568 = vsel %vm1504, %v1416, %v1536
      %v1569 = vsel %vm1505, %v1421, %v1537
      %v1570 = vsel %vm1506, %v1424, %v1538
      %v1571 = vsel %vm1507, %v1429, %v1539
      %v1572 = vsel %vm1508, %v1432, %v1540
      %v1573 = vsel %vm1509, %v1437, %v1541
      %v1574 = vsel %vm1510, %v1440, %v1542
      %v1575 = vsel %vm1511, %v1445, %v1543
      %v1576 = vsel %vm1512, %v1448, %v1544
      %v1577 = vsel %vm1513, %v1453, %v1545
      %v1578 = vsel %vm1514, %v1456, %v1546
      %v1579 = vsel %vm1515, %v1461, %v1547
      %v1580 = vsel %vm1516, %v1464, %v1548
      %v1581 = vsel %vm1517, %v1469, %v1549
      %v1582 = vsel %vm1518, %v1472, %v1550
      %v1583 = vsel %vm1519, %v1477, %v1551
      %v1584 = vsel %vm1520, %v1480, %v1552
      %v1585 = vsel %vm1521, %v1485, %v1553
      %v1586 = vsel %vm1522, %v1488, %v1554
      %v1587 = vmul.f32 %v1555, 3.0
      %v1588 = vmul.f32 %v1556, 3.0
      %v1589 = vmul.f32 %v1559, 3.0
      %v1590 = vmul.f32 %v1560, 3.0
      %v1591 = vmul.f32 %v1563, 3.0
      %v1592 = vmul.f32 %v1564, 3.0
      %v1593 = vmul.f32 %v1567, 3.0
      %v1594 = vmul.f32 %v1568, 3.0
      %v1595 = vmul.f32 %v1571, 3.0
      %v1596 = vmul.f32 %v1572, 3.0
      %v1597 = vmul.f32 %v1575, 3.0
      %v1598 = vmul.f32 %v1576, 3.0
      %v1599 = vmul.f32 %v1579, 3.0
      %v1600 = vmul.f32 %v1580, 3.0
      %v1601 = vmul.f32 %v1583, 3.0
      %v1602 = vmul.f32 %v1584, 3.0
      %v1603 = vadd.f32 %v1557, %v1587
      %v1604 = vadd.f32 %v1558, %v1588
      %v1605 = vadd.f32 %v1557, %v1589
      %v1606 = vadd.f32 %v1558, %v1590
      %v1607 = vadd.f32 %v1561, %v1591
      %v1608 = vadd.f32 %v1562, %v1592
      %v1609 = vadd.f32 %v1565, %v1593
      %v1610 = vadd.f32 %v1566, %v1594
      %v1611 = vadd.f32 %v1569, %v1595
      %v1612 = vadd.f32 %v1570, %v1596
      %v1613 = vadd.f32 %v1573, %v1597
      %v1614 = vadd.f32 %v1574, %v1598
      %v1615 = vadd.f32 %v1577, %v1599
      %v1616 = vadd.f32 %v1578, %v1600
      %v1617 = vadd.f32 %v1581, %v1601
      %v1618 = vadd.f32 %v1582, %v1602
      %v1619 = vmul.f32 %v1557, 3.0
      %v1620 = vmul.f32 %v1558, 3.0
      %v1621 = vmul.f32 %v1561, 3.0
      %v1622 = vmul.f32 %v1562, 3.0
      %v1623 = vmul.f32 %v1565, 3.0
      %v1624 = vmul.f32 %v1566, 3.0
      %v1625 = vmul.f32 %v1569, 3.0
      %v1626 = vmul.f32 %v1570, 3.0
      %v1627 = vmul.f32 %v1573, 3.0
      %v1628 = vmul.f32 %v1574, 3.0
      %v1629 = vmul.f32 %v1577, 3.0
      %v1630 = vmul.f32 %v1578, 3.0
      %v1631 = vmul.f32 %v1581, 3.0
      %v1632 = vmul.f32 %v1582, 3.0
      %v1633 = vmul.f32 %v1585, 3.0
      %v1634 = vmul.f32 %v1586, 3.0
      %v1635 = vadd.f32 %v1603, %v1619
      %v1636 = vadd.f32 %v1604, %v1620
      %v1637 = vadd.f32 %v1605, %v1621
      %v1638 = vadd.f32 %v1606, %v1622
      %v1639 = vadd.f32 %v1607, %v1623
      %v1640 = vadd.f32 %v1608, %v1624
      %v1641 = vadd.f32 %v1609, %v1625
      %v1642 = vadd.f32 %v1610, %v1626
      %v1643 = vadd.f32 %v1611, %v1627
      %v1644 = vadd.f32 %v1612, %v1628
      %v1645 = vadd.f32 %v1613, %v1629
      %v1646 = vadd.f32 %v1614, %v1630
      %v1647 = vadd.f32 %v1615, %v1631
      %v1648 = vadd.f32 %v1616, %v1632
      %v1649 = vadd.f32 %v1617, %v1633
      %v1650 = vadd.f32 %v1618, %v1634
      %v1651 = vadd.f32 %v1635, %v1559
      %v1652 = vadd.f32 %v1636, %v1560
      %v1653 = vadd.f32 %v1637, %v1563
      %v1654 = vadd.f32 %v1638, %v1564
      %v1655 = vadd.f32 %v1639, %v1567
      %v1656 = vadd.f32 %v1640, %v1568
      %v1657 = vadd.f32 %v1641, %v1571
      %v1658 = vadd.f32 %v1642, %v1572
      %v1659 = vadd.f32 %v1643, %v1575
      %v1660 = vadd.f32 %v1644, %v1576
      %v1661 = vadd.f32 %v1645, %v1579
      %v1662 = vadd.f32 %v1646, %v1580
      %v1663 = vadd.f32 %v1647, %v1583
      %v1664 = vadd.f32 %v1648, %v1584
      %v1665 = vadd.f32 %v1649, %v1583
      %v1666 = vadd.f32 %v1650, %v1584
      %v1675 = vrot.slane %v1651, 1
      %v1676 = vrot.slane %v1653, 1
      %v1677 = vrot.slane %v1655, 1
      %v1678 = vrot.slane %v1657, 1
      %v1679 = vrot.slane %v1659, 1
      %v1680 = vrot.slane %v1661, 1
      %v1681 = vrot.slane %v1663, 1
      %v1682 = vrot.slane %v1665, 1
      %vm1699 = vcmask 1040384
      %v1700 = vrot.slane %v1651, 7
      %v1701 = vrot.slane %v1652, 7
      %v1702 = vsel %vm1699, %v1700, %v1701
      %v1703 = vrot.slane %v1653, 7
      %v1704 = vrot.slane %v1654, 7
      %v1705 = vsel %vm1699, %v1703, %v1704
      %v1706 = vrot.slane %v1655, 7
      %v1707 = vrot.slane %v1656, 7
      %v1708 = vsel %vm1699, %v1706, %v1707
      %v1709 = vrot.slane %v1657, 7
      %v1710 = vrot.slane %v1658, 7
      %v1711 = vsel %vm1699, %v1709, %v1710
      %v1712 = vrot.slane %v1659, 7
      %v1713 = vrot.slane %v1660, 7
      %v1714 = vsel %vm1699, %v1712, %v1713
      %v1715 = vrot.slane %v1661, 7
      %v1716 = vrot.slane %v1662, 7
      %v1717 = vsel %vm1699, %v1715, %v1716
      %v1718 = vrot.slane %v1663, 7
      %v1719 = vrot.slane %v1664, 7
      %v1720 = vsel %vm1699, %v1718, %v1719
      %v1721 = vrot.slane %v1665, 7
      %v1722 = vrot.slane %v1666, 7
      %v1723 = vsel %vm1699, %v1721, %v1722
      %v1740 = vrot.slane %v1652, 5
      %v1741 = vrot.slane %v1654, 5
      %v1742 = vrot.slane %v1656, 5
      %v1743 = vrot.slane %v1658, 5
      %v1744 = vrot.slane %v1660, 5
      %v1745 = vrot.slane %v1662, 5
      %v1746 = vrot.slane %v1664, 5
      %v1747 = vrot.slane %v1666, 5
      %v1756 = vsel %vm1699, %v1675, %v1700
      %v1757 = vsel %vm1699, %v1676, %v1703
      %v1758 = vsel %vm1699, %v1677, %v1706
      %v1759 = vsel %vm1699, %v1678, %v1709
      %v1760 = vsel %vm1699, %v1679, %v1712
      %v1761 = vsel %vm1699, %v1680, %v1715
      %v1762 = vsel %vm1699, %v1681, %v1718
      %v1763 = vsel %vm1699, %v1682, %v1721
      %v1764 = vsel %vm1699, %v1701, %v1740
      %v1765 = vsel %vm1699, %v1704, %v1741
      %v1766 = vsel %vm1699, %v1707, %v1742
      %v1767 = vsel %vm1699, %v1710, %v1743
      %v1768 = vsel %vm1699, %v1713, %v1744
      %v1769 = vsel %vm1699, %v1716, %v1745
      %v1770 = vsel %vm1699, %v1719, %v1746
      %v1771 = vsel %vm1699, %v1722, %v1747
      %v1788 = vcombine.high %v1756, %v1756
      %v1790 = vunpack.c.l.s4 1983009808
      %v1791 = vunpack.c.0.s8 %v1790
      %v1792 = vlaneseq
      %v1793 = vshrl.u32 %v1792, 7
      %v1794 = vsub.s32 %v1791, %v1793
      %v1795 = vrot.slane %v1756, %v1794
      %v1797 = vunpack.c.l.s4 1983009808
      %v1798 = vunpack.c.0.s8 %v1797
      %v1799 = vlaneseq
      %v1800 = vshrl.u32 %v1799, 7
      %v1801 = vsub.s32 %v1798, %v1800
      %v1802 = vrot.slane %v1788, %v1801
      %v1803 = vcombine.high %v1795, %v1795
      %v1804 = vcombine.high %v1802, %v1802
      %v1805 = vcombine.high %v1702, %v1702
      %v1807 = vunpack.c.l.s4 1983009808
      %v1808 = vunpack.c.0.s8 %v1807
      %v1809 = vlaneseq
      %v1810 = vshrl.u32 %v1809, 7
      %v1811 = vsub.s32 %v1808, %v1810
      %v1812 = vrot.slane %v1702, %v1811
      %v1814 = vunpack.c.l.s4 1983009808
      %v1815 = vunpack.c.0.s8 %v1814
      %v1816 = vlaneseq
      %v1817 = vshrl.u32 %v1816, 7
      %v1818 = vsub.s32 %v1815, %v1817
      %v1819 = vrot.slane %v1805, %v1818
      %v1820 = vcombine.high %v1812, %v1812
      %v1821 = vcombine.high %v1819, %v1819
      %v1823 = vunpack.c.l.s4 1983009808
      %v1824 = vunpack.c.0.s8 %v1823
      %v1825 = vlaneseq
      %v1826 = vshrl.u32 %v1825, 7
      %v1827 = vsub.s32 %v1824, %v1826
      %v1828 = vrot.slane %v1764, %v1827
      %v1829 = vcombine.high %v1757, %v1757
      %v1831 = vunpack.c.l.s4 1983009808
      %v1832 = vunpack.c.0.s8 %v1831
      %v1833 = vlaneseq
      %v1834 = vshrl.u32 %v1833, 7
      %v1835 = vsub.s32 %v1832, %v1834
      %v1836 = vrot.slane %v1757, %v1835
      %v1838 = vunpack.c.l.s4 1983009808
      %v1839 = vunpack.c.0.s8 %v1838
      %v1840 = vlaneseq
      %v1841 = vshrl.u32 %v1840, 7
      %v1842 = vsub.s32 %v1839, %v1841
      %v1843 = vrot.slane %v1829, %v1842
      %v1844 = vcombine.high %v1836, %v1836
      %v1845 = vcombine.high %v1843, %v1843
      %v1846 = vcombine.high %v1705, %v1705
      %v1848 = vunpack.c.l.s4 1983009808
      %v1849 = vunpack.c.0.s8 %v1848
      %v1850 = vlaneseq
      %v1851 = vshrl.u32 %v1850, 7
      %v1852 = vsub.s32 %v1849, %v1851
      %v1853 = vrot.slane %v1705, %v1852
      %v1855 = vunpack.c.l.s4 1983009808
      %v1856 = vunpack.c.0.s8 %v1855
      %v1857 = vlaneseq
      %v1858 = vshrl.u32 %v1857, 7
      %v1859 = vsub.s32 %v1856, %v1858
      %v1860 = vrot.slane %v1846, %v1859
      %v1861 = vcombine.high %v1853, %v1853
      %v1862 = vcombine.high %v1860, %v1860
      %v1864 = vunpack.c.l.s4 1983009808
      %v1865 = vunpack.c.0.s8 %v1864
      %v1866 = vlaneseq
      %v1867 = vshrl.u32 %v1866, 7
      %v1868 = vsub.s32 %v1865, %v1867
      %v1869 = vrot.slane %v1765, %v1868
      %v1870 = vcombine.high %v1758, %v1758
      %v1872 = vunpack.c.l.s4 1983009808
      %v1873 = vunpack.c.0.s8 %v1872
      %v1874 = vlaneseq
      %v1875 = vshrl.u32 %v1874, 7
      %v1876 = vsub.s32 %v1873, %v1875
      %v1877 = vrot.slane %v1758, %v1876
      %v1879 = vunpack.c.l.s4 1983009808
      %v1880 = vunpack.c.0.s8 %v1879
      %v1881 = vlaneseq
      %v1882 = vshrl.u32 %v1881, 7
      %v1883 = vsub.s32 %v1880, %v1882
      %v1884 = vrot.slane %v1870, %v1883
      %v1885 = vcombine.high %v1877, %v1877
      %v1886 = vcombine.high %v1884, %v1884
      %v1887 = vcombine.high %v1708, %v1708
      %v1889 = vunpack.c.l.s4 1983009808
      %v1890 = vunpack.c.0.s8 %v1889
      %v1891 = vlaneseq
      %v1892 = vshrl.u32 %v1891, 7
      %v1893 = vsub.s32 %v1890, %v1892
      %v1894 = vrot.slane %v1708, %v1893
      %v1896 = vunpack.c.l.s4 1983009808
      %v1897 = vunpack.c.0.s8 %v1896
      %v1898 = vlaneseq
      %v1899 = vshrl.u32 %v1898, 7
      %v1900 = vsub.s32 %v1897, %v1899
      %v1901 = vrot.slane %v1887, %v1900
      %v1902 = vcombine.high %v1894, %v1894
      %v1903 = vcombine.high %v1901, %v1901
      %v1905 = vunpack.c.l.s4 1983009808
      %v1906 = vunpack.c.0.s8 %v1905
      %v1907 = vlaneseq
      %v1908 = vshrl.u32 %v1907, 7
      %v1909 = vsub.s32 %v1906, %v1908
      %v1910 = vrot.slane %v1766, %v1909
      %v1911 = vcombine.high %v1759, %v1759
      %v1913 = vunpack.c.l.s4 1983009808
      %v1914 = vunpack.c.0.s8 %v1913
      %v1915 = vlaneseq
      %v1916 = vshrl.u32 %v1915, 7
      %v1917 = vsub.s32 %v1914, %v1916
      %v1918 = vrot.slane %v1759, %v1917
      %v1920 = vunpack.c.l.s4 1983009808
      %v1921 = vunpack.c.0.s8 %v1920
      %v1922 = vlaneseq
      %v1923 = vshrl.u32 %v1922, 7
      %v1924 = vsub.s32 %v1921, %v1923
      %v1925 = vrot.slane %v1911, %v1924
      %v1926 = vcombine.high %v1918, %v1918
      %v1927 = vcombine.high %v1925, %v1925
      %v1928 = vcombine.high %v1711, %v1711
      %v1930 = vunpack.c.l.s4 1983009808
      %v1931 = vunpack.c.0.s8 %v1930
      %v1932 = vlaneseq
      %v1933 = vshrl.u32 %v1932, 7
      %v1934 = vsub.s32 %v1931, %v1933
      %v1935 = vrot.slane %v1711, %v1934
      %v1937 = vunpack.c.l.s4 1983009808
      %v1938 = vunpack.c.0.s8 %v1937
      %v1939 = vlaneseq
      %v1940 = vshrl.u32 %v1939, 7
      %v1941 = vsub.s32 %v1938, %v1940
      %v1942 = vrot.slane %v1928, %v1941
      %v1943 = vcombine.high %v1935, %v1935
      %v1944 = vcombine.high %v1942, %v1942
      %v1946 = vunpack.c.l.s4 1983009808
      %v1947 = vunpack.c.0.s8 %v1946
      %v1948 = vlaneseq
      %v1949 = vshrl.u32 %v1948, 7
      %v1950 = vsub.s32 %v1947, %v1949
      %v1951 = vrot.slane %v1767, %v1950
      %v1952 = vcombine.high %v1760, %v1760
      %v1954 = vunpack.c.l.s4 1983009808
      %v1955 = vunpack.c.0.s8 %v1954
      %v1956 = vlaneseq
      %v1957 = vshrl.u32 %v1956, 7
      %v1958 = vsub.s32 %v1955, %v1957
      %v1959 = vrot.slane %v1760, %v1958
      %v1961 = vunpack.c.l.s4 1983009808
      %v1962 = vunpack.c.0.s8 %v1961
      %v1963 = vlaneseq
      %v1964 = vshrl.u32 %v1963, 7
      %v1965 = vsub.s32 %v1962, %v1964
      %v1966 = vrot.slane %v1952, %v1965
      %v1967 = vcombine.high %v1959, %v1959
      %v1968 = vcombine.high %v1966, %v1966
      %v1969 = vcombine.high %v1714, %v1714
      %v1971 = vunpack.c.l.s4 1983009808
      %v1972 = vunpack.c.0.s8 %v1971
      %v1973 = vlaneseq
      %v1974 = vshrl.u32 %v1973, 7
      %v1975 = vsub.s32 %v1972, %v1974
      %v1976 = vrot.slane %v1714, %v1975
      %v1978 = vunpack.c.l.s4 1983009808
      %v1979 = vunpack.c.0.s8 %v1978
      %v1980 = vlaneseq
      %v1981 = vshrl.u32 %v1980, 7
      %v1982 = vsub.s32 %v1979, %v1981
      %v1983 = vrot.slane %v1969, %v1982
      %v1984 = vcombine.high %v1976, %v1976
      %v1985 = vcombine.high %v1983, %v1983
      %v1987 = vunpack.c.l.s4 1983009808
      %v1988 = vunpack.c.0.s8 %v1987
      %v1989 = vlaneseq
      %v1990 = vshrl.u32 %v1989, 7
      %v1991 = vsub.s32 %v1988, %v1990
      %v1992 = vrot.slane %v1768, %v1991
      %v1993 = vcombine.high %v1761, %v1761
      %v1995 = vunpack.c.l.s4 1983009808
      %v1996 = vunpack.c.0.s8 %v1995
      %v1997 = vlaneseq
      %v1998 = vshrl.u32 %v1997, 7
      %v1999 = vsub.s32 %v1996, %v1998
      %v2000 = vrot.slane %v1761, %v1999
      %v2002 = vunpack.c.l.s4 1983009808
      %v2003 = vunpack.c.0.s8 %v2002
      %v2004 = vlaneseq
      %v2005 = vshrl.u32 %v2004, 7
      %v2006 = vsub.s32 %v2003, %v2005
      %v2007 = vrot.slane %v1993, %v2006
      %v2008 = vcombine.high %v2000, %v2000
      %v2009 = vcombine.high %v2007, %v2007
      %v2010 = vcombine.high %v1717, %v1717
      %v2012 = vunpack.c.l.s4 1983009808
      %v2013 = vunpack.c.0.s8 %v2012
      %v2014 = vlaneseq
      %v2015 = vshrl.u32 %v2014, 7
      %v2016 = vsub.s32 %v2013, %v2015
      %v2017 = vrot.slane %v1717, %v2016
      %v2019 = vunpack.c.l.s4 1983009808
      %v2020 = vunpack.c.0.s8 %v2019
      %v2021 = vlaneseq
      %v2022 = vshrl.u32 %v2021, 7
      %v2023 = vsub.s32 %v2020, %v2022
      %v2024 = vrot.slane %v2010, %v2023
      %v2025 = vcombine.high %v2017, %v2017
      %v2026 = vcombine.high %v2024, %v2024
      %v2028 = vunpack.c.l.s4 1983009808
      %v2029 = vunpack.c.0.s8 %v2028
      %v2030 = vlaneseq
      %v2031 = vshrl.u32 %v2030, 7
      %v2032 = vsub.s32 %v2029, %v2031
      %v2033 = vrot.slane %v1769, %v2032
      %v2034 = vcombine.high %v1762, %v1762
      %v2036 = vunpack.c.l.s4 1983009808
      %v2037 = vunpack.c.0.s8 %v2036
      %v2038 = vlaneseq
      %v2039 = vshrl.u32 %v2038, 7
      %v2040 = vsub.s32 %v2037, %v2039
      %v2041 = vrot.slane %v1762, %v2040
      %v2043 = vunpack.c.l.s4 1983009808
      %v2044 = vunpack.c.0.s8 %v2043
      %v2045 = vlaneseq
      %v2046 = vshrl.u32 %v2045, 7
      %v2047 = vsub.s32 %v2044, %v2046
      %v2048 = vrot.slane %v2034, %v2047
      %v2049 = vcombine.high %v2041, %v2041
      %v2050 = vcombine.high %v2048, %v2048
      %v2051 = vcombine.high %v1720, %v1720
      %v2053 = vunpack.c.l.s4 1983009808
      %v2054 = vunpack.c.0.s8 %v2053
      %v2055 = vlaneseq
      %v2056 = vshrl.u32 %v2055, 7
      %v2057 = vsub.s32 %v2054, %v2056
      %v2058 = vrot.slane %v1720, %v2057
      %v2060 = vunpack.c.l.s4 1983009808
      %v2061 = vunpack.c.0.s8 %v2060
      %v2062 = vlaneseq
      %v2063 = vshrl.u32 %v2062, 7
      %v2064 = vsub.s32 %v2061, %v2063
      %v2065 = vrot.slane %v2051, %v2064
      %v2066 = vcombine.high %v2058, %v2058
      %v2067 = vcombine.high %v2065, %v2065
      %v2069 = vunpack.c.l.s4 1983009808
      %v2070 = vunpack.c.0.s8 %v2069
      %v2071 = vlaneseq
      %v2072 = vshrl.u32 %v2071, 7
      %v2073 = vsub.s32 %v2070, %v2072
      %v2074 = vrot.slane %v1770, %v2073
      %v2075 = vcombine.high %v1763, %v1763
      %v2077 = vunpack.c.l.s4 1983009808
      %v2078 = vunpack.c.0.s8 %v2077
      %v2079 = vlaneseq
      %v2080 = vshrl.u32 %v2079, 7
      %v2081 = vsub.s32 %v2078, %v2080
      %v2082 = vrot.slane %v1763, %v2081
      %v2084 = vunpack.c.l.s4 1983009808
      %v2085 = vunpack.c.0.s8 %v2084
      %v2086 = vlaneseq
      %v2087 = vshrl.u32 %v2086, 7
      %v2088 = vsub.s32 %v2085, %v2087
      %v2089 = vrot.slane %v2075, %v2088
      %v2090 = vcombine.high %v2082, %v2082
      %v2091 = vcombine.high %v2089, %v2089
      %v2092 = vcombine.high %v1723, %v1723
      %v2094 = vunpack.c.l.s4 1983009808
      %v2095 = vunpack.c.0.s8 %v2094
      %v2096 = vlaneseq
      %v2097 = vshrl.u32 %v2096, 7
      %v2098 = vsub.s32 %v2095, %v2097
      %v2099 = vrot.slane %v1723, %v2098
      %v2101 = vunpack.c.l.s4 1983009808
      %v2102 = vunpack.c.0.s8 %v2101
      %v2103 = vlaneseq
      %v2104 = vshrl.u32 %v2103, 7
      %v2105 = vsub.s32 %v2102, %v2104
      %v2106 = vrot.slane %v2092, %v2105
      %v2107 = vcombine.high %v2099, %v2099
      %v2108 = vcombine.high %v2106, %v2106
      %v2110 = vunpack.c.l.s4 1983009808
      %v2111 = vunpack.c.0.s8 %v2110
      %v2112 = vlaneseq
      %v2113 = vshrl.u32 %v2112, 7
      %v2114 = vsub.s32 %v2111, %v2113
      %v2115 = vrot.slane %v1771, %v2114
      %v2188 = vmul.f32 %v1795, 3.0
      %v2189 = vmul.f32 %v1803, 3.0
      %v2190 = vmul.f32 %v1802, 3.0
      %v2191 = vmul.f32 %v1804, 3.0
      %v2192 = vmul.f32 %v1812, 3.0
      %v2193 = vmul.f32 %v1820, 3.0
      %v2194 = vmul.f32 %v1819, 3.0
      %v2195 = vmul.f32 %v1821, 3.0
      %v2196 = vmul.f32 %v1836, 3.0
      %v2197 = vmul.f32 %v1844, 3.0
      %v2198 = vmul.f32 %v1843, 3.0
      %v2199 = vmul.f32 %v1845, 3.0
      %v2200 = vmul.f32 %v1853, 3.0
      %v2201 = vmul.f32 %v1861, 3.0
      %v2202 = vmul.f32 %v1860, 3.0
      %v2203 = vmul.f32 %v1862, 3.0
      %v2204 = vmul.f32 %v1877, 3.0
      %v2205 = vmul.f32 %v1885, 3.0
      %v2206 = vmul.f32 %v1884, 3.0
      %v2207 = vmul.f32 %v1886, 3.0
      %v2208 = vmul.f32 %v1894, 3.0
      %v2209 = vmul.f32 %v1902, 3.0
      %v2210 = vmul.f32 %v1901, 3.0
      %v2211 = vmul.f32 %v1903, 3.0
      %v2212 = vmul.f32 %v1918, 3.0
      %v2213 = vmul.f32 %v1926, 3.0
      %v2214 = vmul.f32 %v1925, 3.0
      %v2215 = vmul.f32 %v1927, 3.0
      %v2216 = vmul.f32 %v1935, 3.0
      %v2217 = vmul.f32 %v1943, 3.0
      %v2218 = vmul.f32 %v1942, 3.0
      %v2219 = vmul.f32 %v1944, 3.0
      %v2220 = vmul.f32 %v1959, 3.0
      %v2221 = vmul.f32 %v1967, 3.0
      %v2222 = vmul.f32 %v1966, 3.0
      %v2223 = vmul.f32 %v1968, 3.0
      %v2224 = vmul.f32 %v1976, 3.0
      %v2225 = vmul.f32 %v1984, 3.0
      %v2226 = vmul.f32 %v1983, 3.0
      %v2227 = vmul.f32 %v1985, 3.0
      %v2228 = vmul.f32 %v2000, 3.0
      %v2229 = vmul.f32 %v2008, 3.0
      %v2230 = vmul.f32 %v2007, 3.0
      %v2231 = vmul.f32 %v2009, 3.0
      %v2232 = vmul.f32 %v2017, 3.0
      %v2233 = vmul.f32 %v2025, 3.0
      %v2234 = vmul.f32 %v2024, 3.0
      %v2235 = vmul.f32 %v2026, 3.0
      %v2236 = vmul.f32 %v2041, 3.0
      %v2237 = vmul.f32 %v2049, 3.0
      %v2238 = vmul.f32 %v2048, 3.0
      %v2239 = vmul.f32 %v2050, 3.0
      %v2240 = vmul.f32 %v2058, 3.0
      %v2241 = vmul.f32 %v2066, 3.0
      %v2242 = vmul.f32 %v2065, 3.0
      %v2243 = vmul.f32 %v2067, 3.0
      %v2244 = vmul.f32 %v2082, 3.0
      %v2245 = vmul.f32 %v2090, 3.0
      %v2246 = vmul.f32 %v2089, 3.0
      %v2247 = vmul.f32 %v2091, 3.0
      %v2248 = vmul.f32 %v2099, 3.0
      %v2249 = vmul.f32 %v2107, 3.0
      %v2250 = vmul.f32 %v2106, 3.0
      %v2251 = vmul.f32 %v2108, 3.0
      %v2316 = vrot.slane %v2188, 7
      %v2317 = vrot.slane %v2316, 2
      %v2318 = vrot.slane %v2189, 7
      %v2319 = vrot.slane %v2318, 2
      %v2320 = vrot.slane %v2190, 7
      %v2321 = vrot.slane %v2320, 2
      %v2322 = vrot.slane %v2191, 7
      %v2323 = vrot.slane %v2322, 2
      %v2324 = vrot.slane %v2192, 7
      %v2325 = vrot.slane %v2324, 2
      %v2326 = vrot.slane %v2193, 7
      %v2327 = vrot.slane %v2326, 2
      %v2328 = vrot.slane %v2194, 7
      %v2329 = vrot.slane %v2328, 2
      %v2330 = vrot.slane %v2195, 7
      %v2331 = vrot.slane %v2330, 2
      %v2332 = vrot.slane %v2196, 7
      %v2333 = vrot.slane %v2332, 2
      %v2334 = vrot.slane %v2197, 7
      %v2335 = vrot.slane %v2334, 2
      %v2336 = vrot.slane %v2198, 7
      %v2337 = vrot.slane %v2336, 2
      %v2338 = vrot.slane %v2199, 7
      %v2339 = vrot.slane %v2338, 2
      %v2340 = vrot.slane %v2200, 7
      %v2341 = vrot.slane %v2340, 2
      %v2342 = vrot.slane %v2201, 7
      %v2343 = vrot.slane %v2342, 2
      %v2344 = vrot.slane %v2202, 7
      %v2345 = vrot.slane %v2344, 2
      %v2346 = vrot.slane %v2203, 7
      %v2347 = vrot.slane %v2346, 2
      %v2348 = vrot.slane %v2204, 7
      %v2349 = vrot.slane %v2348, 2
      %v2350 = vrot.slane %v2205, 7
      %v2351 = vrot.slane %v2350, 2
      %v2352 = vrot.slane %v2206, 7
      %v2353 = vrot.slane %v2352, 2
      %v2354 = vrot.slane %v2207, 7
      %v2355 = vrot.slane %v2354, 2
      %v2356 = vrot.slane %v2208, 7
      %v2357 = vrot.slane %v2356, 2
      %v2358 = vrot.slane %v2209, 7
      %v2359 = vrot.slane %v2358, 2
      %v2360 = vrot.slane %v2210, 7
      %v2361 = vrot.slane %v2360, 2
      %v2362 = vrot.slane %v2211, 7
      %v2363 = vrot.slane %v2362, 2
      %v2364 = vrot.slane %v2212, 7
      %v2365 = vrot.slane %v2364, 2
      %v2366 = vrot.slane %v2213, 7
      %v2367 = vrot.slane %v2366, 2
      %v2368 = vrot.slane %v2214, 7
      %v2369 = vrot.slane %v2368, 2
      %v2370 = vrot.slane %v2215, 7
      %v2371 = vrot.slane %v2370, 2
      %v2372 = vrot.slane %v2216, 7
      %v2373 = vrot.slane %v2372, 2
      %v2374 = vrot.slane %v2217, 7
      %v2375 = vrot.slane %v2374, 2
      %v2376 = vrot.slane %v2218, 7
      %v2377 = vrot.slane %v2376, 2
      %v2378 = vrot.slane %v2219, 7
      %v2379 = vrot.slane %v2378, 2
      %v2380 = vrot.slane %v2220, 7
      %v2381 = vrot.slane %v2380, 2
      %v2382 = vrot.slane %v2221, 7
      %v2383 = vrot.slane %v2382, 2
      %v2384 = vrot.slane %v2222, 7
      %v2385 = vrot.slane %v2384, 2
      %v2386 = vrot.slane %v2223, 7
      %v2387 = vrot.slane %v2386, 2
      %v2388 = vrot.slane %v2224, 7
      %v2389 = vrot.slane %v2388, 2
      %v2390 = vrot.slane %v2225, 7
      %v2391 = vrot.slane %v2390, 2
      %v2392 = vrot.slane %v2226, 7
      %v2393 = vrot.slane %v2392, 2
      %v2394 = vrot.slane %v2227, 7
      %v2395 = vrot.slane %v2394, 2
      %v2396 = vrot.slane %v2228, 7
      %v2397 = vrot.slane %v2396, 2
      %v2398 = vrot.slane %v2229, 7
      %v2399 = vrot.slane %v2398, 2
      %v2400 = vrot.slane %v2230, 7
      %v2401 = vrot.slane %v2400, 2
      %v2402 = vrot.slane %v2231, 7
      %v2403 = vrot.slane %v2402, 2
      %v2404 = vrot.slane %v2232, 7
      %v2405 = vrot.slane %v2404, 2
      %v2406 = vrot.slane %v2233, 7
      %v2407 = vrot.slane %v2406, 2
      %v2408 = vrot.slane %v2234, 7
      %v2409 = vrot.slane %v2408, 2
      %v2410 = vrot.slane %v2235, 7
      %v2411 = vrot.slane %v2410, 2
      %v2412 = vrot.slane %v2236, 7
      %v2413 = vrot.slane %v2412, 2
      %v2414 = vrot.slane %v2237, 7
      %v2415 = vrot.slane %v2414, 2
      %v2416 = vrot.slane %v2238, 7
      %v2417 = vrot.slane %v2416, 2
      %v2418 = vrot.slane %v2239, 7
      %v2419 = vrot.slane %v2418, 2
      %v2420 = vrot.slane %v2240, 7
      %v2421 = vrot.slane %v2420, 2
      %v2422 = vrot.slane %v2241, 7
      %v2423 = vrot.slane %v2422, 2
      %v2424 = vrot.slane %v2242, 7
      %v2425 = vrot.slane %v2424, 2
      %v2426 = vrot.slane %v2243, 7
      %v2427 = vrot.slane %v2426, 2
      %v2428 = vrot.slane %v2244, 7
      %v2429 = vrot.slane %v2428, 2
      %v2430 = vrot.slane %v2245, 7
      %v2431 = vrot.slane %v2430, 2
      %v2432 = vrot.slane %v2246, 7
      %v2433 = vrot.slane %v2432, 2
      %v2434 = vrot.slane %v2247, 7
      %v2435 = vrot.slane %v2434, 2
      %v2436 = vrot.slane %v2248, 7
      %v2437 = vrot.slane %v2436, 2
      %v2438 = vrot.slane %v2249, 7
      %v2439 = vrot.slane %v2438, 2
      %v2440 = vrot.slane %v2250, 7
      %v2441 = vrot.slane %v2440, 2
      %v2442 = vrot.slane %v2251, 7
      %v2443 = vrot.slane %v2442, 2
      %v2508 = vadd.f32 %v1795, %v2317
      %v2509 = vadd.f32 %v1803, %v2319
      %v2510 = vadd.f32 %v1802, %v2321
      %v2511 = vadd.f32 %v1804, %v2323
      %v2512 = vadd.f32 %v1812, %v2325
      %v2513 = vadd.f32 %v1820, %v2327
      %v2514 = vadd.f32 %v1819, %v2329
      %v2515 = vadd.f32 %v1821, %v2331
      %v2516 = vadd.f32 %v1836, %v2333
      %v2517 = vadd.f32 %v1844, %v2335
      %v2518 = vadd.f32 %v1843, %v2337
      %v2519 = vadd.f32 %v1845, %v2339
      %v2520 = vadd.f32 %v1853, %v2341
      %v2521 = vadd.f32 %v1861, %v2343
      %v2522 = vadd.f32 %v1860, %v2345
      %v2523 = vadd.f32 %v1862, %v2347
      %v2524 = vadd.f32 %v1877, %v2349
      %v2525 = vadd.f32 %v1885, %v2351
      %v2526 = vadd.f32 %v1884, %v2353
      %v2527 = vadd.f32 %v1886, %v2355
      %v2528 = vadd.f32 %v1894, %v2357
      %v2529 = vadd.f32 %v1902, %v2359
      %v2530 = vadd.f32 %v1901, %v2361
      %v2531 = vadd.f32 %v1903, %v2363
      %v2532 = vadd.f32 %v1918, %v2365
      %v2533 = vadd.f32 %v1926, %v2367
      %v2534 = vadd.f32 %v1925, %v2369
      %v2535 = vadd.f32 %v1927, %v2371
      %v2536 = vadd.f32 %v1935, %v2373
      %v2537 = vadd.f32 %v1943, %v2375
      %v2538 = vadd.f32 %v1942, %v2377
      %v2539 = vadd.f32 %v1944, %v2379
      %v2540 = vadd.f32 %v1959, %v2381
      %v2541 = vadd.f32 %v1967, %v2383
      %v2542 = vadd.f32 %v1966, %v2385
      %v2543 = vadd.f32 %v1968, %v2387
      %v2544 = vadd.f32 %v1976, %v2389
      %v2545 = vadd.f32 %v1984, %v2391
      %v2546 = vadd.f32 %v1983, %v2393
      %v2547 = vadd.f32 %v1985, %v2395
      %v2548 = vadd.f32 %v2000, %v2397
      %v2549 = vadd.f32 %v2008, %v2399
      %v2550 = vadd.f32 %v2007, %v2401
      %v2551 = vadd.f32 %v2009, %v2403
      %v2552 = vadd.f32 %v2017, %v2405
      %v2553 = vadd.f32 %v2025, %v2407
      %v2554 = vadd.f32 %v2024, %v2409
      %v2555 = vadd.f32 %v2026, %v2411
      %v2556 = vadd.f32 %v2041, %v2413
      %v2557 = vadd.f32 %v2049, %v2415
      %v2558 = vadd.f32 %v2048, %v2417
      %v2559 = vadd.f32 %v2050, %v2419
      %v2560 = vadd.f32 %v2058, %v2421
      %v2561 = vadd.f32 %v2066, %v2423
      %v2562 = vadd.f32 %v2065, %v2425
      %v2563 = vadd.f32 %v2067, %v2427
      %v2564 = vadd.f32 %v2082, %v2429
      %v2565 = vadd.f32 %v2090, %v2431
      %v2566 = vadd.f32 %v2089, %v2433
      %v2567 = vadd.f32 %v2091, %v2435
      %v2568 = vadd.f32 %v2099, %v2437
      %v2569 = vadd.f32 %v2107, %v2439
      %v2570 = vadd.f32 %v2106, %v2441
      %v2571 = vadd.f32 %v2108, %v2443
      %v2572 = vmul.f32 %v1828, 3.0
      %v2573 = vmul.f32 %v1869, 3.0
      %v2574 = vmul.f32 %v1910, 3.0
      %v2575 = vmul.f32 %v1951, 3.0
      %v2576 = vmul.f32 %v1992, 3.0
      %v2577 = vmul.f32 %v2033, 3.0
      %v2578 = vmul.f32 %v2074, 3.0
      %v2579 = vmul.f32 %v2115, 3.0
      %v2580 = vadd.f32 %v2508, %v2189
      %v2581 = vadd.f32 %v2509, %v2190
      %v2582 = vadd.f32 %v2510, %v2191
      %v2583 = vadd.f32 %v2511, %v2192
      %v2584 = vadd.f32 %v2512, %v2193
      %v2585 = vadd.f32 %v2513, %v2194
      %v2586 = vadd.f32 %v2514, %v2195
      %v2587 = vadd.f32 %v2515, %v2572
      %v2588 = vadd.f32 %v2516, %v2197
      %v2589 = vadd.f32 %v2517, %v2198
      %v2590 = vadd.f32 %v2518, %v2199
      %v2591 = vadd.f32 %v2519, %v2200
      %v2592 = vadd.f32 %v2520, %v2201
      %v2593 = vadd.f32 %v2521, %v2202
      %v2594 = vadd.f32 %v2522, %v2203
      %v2595 = vadd.f32 %v2523, %v2573
      %v2596 = vadd.f32 %v2524, %v2205
      %v2597 = vadd.f32 %v2525, %v2206
      %v2598 = vadd.f32 %v2526, %v2207
      %v2599 = vadd.f32 %v2527, %v2208
      %v2600 = vadd.f32 %v2528, %v2209
      %v2601 = vadd.f32 %v2529, %v2210
      %v2602 = vadd.f32 %v2530, %v2211
      %v2603 = vadd.f32 %v2531, %v2574
      %v2604 = vadd.f32 %v2532, %v2213
      %v2605 = vadd.f32 %v2533, %v2214
      %v2606 = vadd.f32 %v2534, %v2215
      %v2607 = vadd.f32 %v2535, %v2216
      %v2608 = vadd.f32 %v2536, %v2217
      %v2609 = vadd.f32 %v2537, %v2218
      %v2610 = vadd.f32 %v2538, %v2219
      %v2611 = vadd.f32 %v2539, %v2575
      %v2612 = vadd.f32 %v2540, %v2221
      %v2613 = vadd.f32 %v2541, %v2222
      %v2614 = vadd.f32 %v2542, %v2223
      %v2615 = vadd.f32 %v2543, %v2224
      %v2616 = vadd.f32 %v2544, %v2225
      %v2617 = vadd.f32 %v2545, %v2226
      %v2618 = vadd.f32 %v2546, %v2227
      %v2619 = vadd.f32 %v2547, %v2576
      %v2620 = vadd.f32 %v2548, %v2229
      %v2621 = vadd.f32 %v2549, %v2230
      %v2622 = vadd.f32 %v2550, %v2231
      %v2623 = vadd.f32 %v2551, %v2232
      %v2624 = vadd.f32 %v2552, %v2233
      %v2625 = vadd.f32 %v2553, %v2234
      %v2626 = vadd.f32 %v2554, %v2235
      %v2627 = vadd.f32 %v2555, %v2577
      %v2628 = vadd.f32 %v2556, %v2237
      %v2629 = vadd.f32 %v2557, %v2238
      %v2630 = vadd.f32 %v2558, %v2239
      %v2631 = vadd.f32 %v2559, %v2240
      %v2632 = vadd.f32 %v2560, %v2241
      %v2633 = vadd.f32 %v2561, %v2242
      %v2634 = vadd.f32 %v2562, %v2243
      %v2635 = vadd.f32 %v2563, %v2578
      %v2636 = vadd.f32 %v2564, %v2245
      %v2637 = vadd.f32 %v2565, %v2246
      %v2638 = vadd.f32 %v2566, %v2247
      %v2639 = vadd.f32 %v2567, %v2248
      %v2640 = vadd.f32 %v2568, %v2249
      %v2641 = vadd.f32 %v2569, %v2250
      %v2642 = vadd.f32 %v2570, %v2251
      %v2643 = vadd.f32 %v2571, %v2579
      %v2644 = vrot.slane %v1803, 7
      %v2645 = vrot.slane %v2644, 2
      %v2646 = vrot.slane %v1802, 7
      %v2647 = vrot.slane %v2646, 2
      %v2648 = vrot.slane %v1804, 7
      %v2649 = vrot.slane %v2648, 2
      %v2650 = vrot.slane %v1812, 7
      %v2651 = vrot.slane %v2650, 2
      %v2652 = vrot.slane %v1820, 7
      %v2653 = vrot.slane %v2652, 2
      %v2654 = vrot.slane %v1819, 7
      %v2655 = vrot.slane %v2654, 2
      %v2656 = vrot.slane %v1821, 7
      %v2657 = vrot.slane %v2656, 2
      %v2658 = vrot.slane %v1828, 7
      %v2659 = vrot.slane %v2658, 2
      %v2660 = vrot.slane %v1844, 7
      %v2661 = vrot.slane %v2660, 2
      %v2662 = vrot.slane %v1843, 7
      %v2663 = vrot.slane %v2662, 2
      %v2664 = vrot.slane %v1845, 7
      %v2665 = vrot.slane %v2664, 2
      %v2666 = vrot.slane %v1853, 7
      %v2667 = vrot.slane %v2666, 2
      %v2668 = vrot.slane %v1861, 7
      %v2669 = vrot.slane %v2668, 2
      %v2670 = vrot.slane %v1860, 7
      %v2671 = vrot.slane %v2670, 2
      %v2672 = vrot.slane %v1862, 7
      %v2673 = vrot.slane %v2672, 2
      %v2674 = vrot.slane %v1869, 7
      %v2675 = vrot.slane %v2674, 2
      %v2676 = vrot.slane %v1885, 7
      %v2677 = vrot.slane %v2676, 2
      %v2678 = vrot.slane %v1884, 7
      %v2679 = vrot.slane %v2678, 2
      %v2680 = vrot.slane %v1886, 7
      %v2681 = vrot.slane %v2680, 2
      %v2682 = vrot.slane %v1894, 7
      %v2683 = vrot.slane %v2682, 2
      %v2684 = vrot.slane %v1902, 7
      %v2685 = vrot.slane %v2684, 2
      %v2686 = vrot.slane %v1901, 7
      %v2687 = vrot.slane %v2686, 2
      %v2688 = vrot.slane %v1903, 7
      %v2689 = vrot.slane %v2688, 2
      %v2690 = vrot.slane %v1910, 7
      %v2691 = vrot.slane %v2690, 2
      %v2692 = vrot.slane %v1926, 7
      %v2693 = vrot.slane %v2692, 2
      %v2694 = vrot.slane %v1925, 7
      %v2695 = vrot.slane %v2694, 2
      %v2696 = vrot.slane %v1927, 7
      %v2697 = vrot.slane %v2696, 2
      %v2698 = vrot.slane %v1935, 7
      %v2699 = vrot.slane %v2698, 2
      %v2700 = vrot.slane %v1943, 7
      %v2701 = vrot.slane %v2700, 2
      %v2702 = vrot.slane %v1942, 7
      %v2703 = vrot.slane %v2702, 2
      %v2704 = vrot.slane %v1944, 7
      %v2705 = vrot.slane %v2704, 2
      %v2706 = vrot.slane %v1951, 7
      %v2707 = vrot.slane %v2706, 2
      %v2708 = vrot.slane %v1967, 7
      %v2709 = vrot.slane %v2708, 2
      %v2710 = vrot.slane %v1966, 7
      %v2711 = vrot.slane %v2710, 2
      %v2712 = vrot.slane %v1968, 7
      %v2713 = vrot.slane %v2712, 2
      %v2714 = vrot.slane %v1976, 7
      %v2715 = vrot.slane %v2714, 2
      %v2716 = vrot.slane %v1984, 7
      %v2717 = vrot.slane %v2716, 2
      %v2718 = vrot.slane %v1983, 7
      %v2719 = vrot.slane %v2718, 2
      %v2720 = vrot.slane %v1985, 7
      %v2721 = vrot.slane %v2720, 2
      %v2722 = vrot.slane %v1992, 7
      %v2723 = vrot.slane %v2722, 2
      %v2724 = vrot.slane %v2008, 7
      %v2725 = vrot.slane %v2724, 2
      %v2726 = vrot.slane %v2007, 7
      %v2727 = vrot.slane %v2726, 2
      %v2728 = vrot.slane %v2009, 7
      %v2729 = vrot.slane %v2728, 2
      %v2730 = vrot.slane %v2017, 7
      %v2731 = vrot.slane %v2730, 2
      %v2732 = vrot.slane %v2025, 7
      %v2733 = vrot.slane %v2732, 2
      %v2734 = vrot.slane %v2024, 7
      %v2735 = vrot.slane %v2734, 2
      %v2736 = vrot.slane %v2026, 7
      %v2737 = vrot.slane %v2736, 2
      %v2738 = vrot.slane %v2033, 7
      %v2739 = vrot.slane %v2738, 2
      %v2740 = vrot.slane %v2049, 7
      %v2741 = vrot.slane %v2740, 2
      %v2742 = vrot.slane %v2048, 7
      %v2743 = vrot.slane %v2742, 2
      %v2744 = vrot.slane %v2050, 7
      %v2745 = vrot.slane %v2744, 2
      %v2746 = vrot.slane %v2058, 7
      %v2747 = vrot.slane %v2746, 2
      %v2748 = vrot.slane %v2066, 7
      %v2749 = vrot.slane %v2748, 2
      %v2750 = vrot.slane %v2065, 7
      %v2751 = vrot.slane %v2750, 2
      %v2752 = vrot.slane %v2067, 7
      %v2753 = vrot.slane %v2752, 2
      %v2754 = vrot.slane %v2074, 7
      %v2755 = vrot.slane %v2754, 2
      %v2756 = vrot.slane %v2090, 7
      %v2757 = vrot.slane %v2756, 2
      %v2758 = vrot.slane %v2089, 7
      %v2759 = vrot.slane %v2758, 2
      %v2760 = vrot.slane %v2091, 7
      %v2761 = vrot.slane %v2760, 2
      %v2762 = vrot.slane %v2099, 7
      %v2763 = vrot.slane %v2762, 2
      %v2764 = vrot.slane %v2107, 7
      %v2765 = vrot.slane %v2764, 2
      %v2766 = vrot.slane %v2106, 7
      %v2767 = vrot.slane %v2766, 2
      %v2768 = vrot.slane %v2108, 7
      %v2769 = vrot.slane %v2768, 2
      %v2770 = vrot.slane %v2115, 7
      %v2771 = vrot.slane %v2770, 2
      %v2836 = vadd.f32 %v2580, %v2645
      %v2837 = vadd.f32 %v2581, %v2647
      %v2838 = vadd.f32 %v2582, %v2649
      %v2839 = vadd.f32 %v2583, %v2651
      %v2840 = vadd.f32 %v2584, %v2653
      %v2841 = vadd.f32 %v2585, %v2655
      %v2842 = vadd.f32 %v2586, %v2657
      %v2843 = vadd.f32 %v2587, %v2659
      %v2844 = vadd.f32 %v2588, %v2661
      %v2845 = vadd.f32 %v2589, %v2663
      %v2846 = vadd.f32 %v2590, %v2665
      %v2847 = vadd.f32 %v2591, %v2667
      %v2848 = vadd.f32 %v2592, %v2669
      %v2849 = vadd.f32 %v2593, %v2671
      %v2850 = vadd.f32 %v2594, %v2673
      %v2851 = vadd.f32 %v2595, %v2675
      %v2852 = vadd.f32 %v2596, %v2677
      %v2853 = vadd.f32 %v2597, %v2679
      %v2854 = vadd.f32 %v2598, %v2681
      %v2855 = vadd.f32 %v2599, %v2683
      %v2856 = vadd.f32 %v2600, %v2685
      %v2857 = vadd.f32 %v2601, %v2687
      %v2858 = vadd.f32 %v2602, %v2689
      %v2859 = vadd.f32 %v2603, %v2691
      %v2860 = vadd.f32 %v2604, %v2693
      %v2861 = vadd.f32 %v2605, %v2695
      %v2862 = vadd.f32 %v2606, %v2697
      %v2863 = vadd.f32 %v2607, %v2699
      %v2864 = vadd.f32 %v2608, %v2701
      %v2865 = vadd.f32 %v2609, %v2703
      %v2866 = vadd.f32 %v2610, %v2705
      %v2867 = vadd.f32 %v2611, %v2707
      %v2868 = vadd.f32 %v2612, %v2709
      %v2869 = vadd.f32 %v2613, %v2711
      %v2870 = vadd.f32 %v2614, %v2713
      %v2871 = vadd.f32 %v2615, %v2715
      %v2872 = vadd.f32 %v2616, %v2717
      %v2873 = vadd.f32 %v2617, %v2719
      %v2874 = vadd.f32 %v2618, %v2721
      %v2875 = vadd.f32 %v2619, %v2723
      %v2876 = vadd.f32 %v2620, %v2725
      %v2877 = vadd.f32 %v2621, %v2727
      %v2878 = vadd.f32 %v2622, %v2729
      %v2879 = vadd.f32 %v2623, %v2731
      %v2880 = vadd.f32 %v2624, %v2733
      %v2881 = vadd.f32 %v2625, %v2735
      %v2882 = vadd.f32 %v2626, %v2737
      %v2883 = vadd.f32 %v2627, %v2739
      %v2884 = vadd.f32 %v2628, %v2741
      %v2885 = vadd.f32 %v2629, %v2743
      %v2886 = vadd.f32 %v2630, %v2745
      %v2887 = vadd.f32 %v2631, %v2747
      %v2888 = vadd.f32 %v2632, %v2749
      %v2889 = vadd.f32 %v2633, %v2751
      %v2890 = vadd.f32 %v2634, %v2753
      %v2891 = vadd.f32 %v2635, %v2755
      %v2892 = vadd.f32 %v2636, %v2757
      %v2893 = vadd.f32 %v2637, %v2759
      %v2894 = vadd.f32 %v2638, %v2761
      %v2895 = vadd.f32 %v2639, %v2763
      %v2896 = vadd.f32 %v2640, %v2765
      %v2897 = vadd.f32 %v2641, %v2767
      %v2898 = vadd.f32 %v2642, %v2769
      %v2899 = vadd.f32 %v2643, %v2771
      %v2900 = vmul.f32 %v2836, 0.015625
      %v2901 = vmul.f32 %v2837, 0.015625
      %v2902 = vmul.f32 %v2838, 0.015625
      %v2903 = vmul.f32 %v2839, 0.015625
      %v2904 = vmul.f32 %v2840, 0.015625
      %v2905 = vmul.f32 %v2841, 0.015625
      %v2906 = vmul.f32 %v2842, 0.015625
      %v2907 = vmul.f32 %v2843, 0.015625
      %v2908 = vmul.f32 %v2844, 0.015625
      %v2909 = vmul.f32 %v2845, 0.015625
      %v2910 = vmul.f32 %v2846, 0.015625
      %v2911 = vmul.f32 %v2847, 0.015625
      %v2912 = vmul.f32 %v2848, 0.015625
      %v2913 = vmul.f32 %v2849, 0.015625
      %v2914 = vmul.f32 %v2850, 0.015625
      %v2915 = vmul.f32 %v2851, 0.015625
      %v2916 = vmul.f32 %v2852, 0.015625
      %v2917 = vmul.f32 %v2853, 0.015625
      %v2918 = vmul.f32 %v2854, 0.015625
      %v2919 = vmul.f32 %v2855, 0.015625
      %v2920 = vmul.f32 %v2856, 0.015625
      %v2921 = vmul.f32 %v2857, 0.015625
      %v2922 = vmul.f32 %v2858, 0.015625
      %v2923 = vmul.f32 %v2859, 0.015625
      %v2924 = vmul.f32 %v2860, 0.015625
      %v2925 = vmul.f32 %v2861, 0.015625
      %v2926 = vmul.f32 %v2862, 0.015625
      %v2927 = vmul.f32 %v2863, 0.015625
      %v2928 = vmul.f32 %v2864, 0.015625
      %v2929 = vmul.f32 %v2865, 0.015625
      %v2930 = vmul.f32 %v2866, 0.015625
      %v2931 = vmul.f32 %v2867, 0.015625
      %v2932 = vmul.f32 %v2868, 0.015625
      %v2933 = vmul.f32 %v2869, 0.015625
      %v2934 = vmul.f32 %v2870, 0.015625
      %v2935 = vmul.f32 %v2871, 0.015625
      %v2936 = vmul.f32 %v2872, 0.015625
      %v2937 = vmul.f32 %v2873, 0.015625
      %v2938 = vmul.f32 %v2874, 0.015625
      %v2939 = vmul.f32 %v2875, 0.015625
      %v2940 = vmul.f32 %v2876, 0.015625
      %v2941 = vmul.f32 %v2877, 0.015625
      %v2942 = vmul.f32 %v2878, 0.015625
      %v2943 = vmul.f32 %v2879, 0.015625
      %v2944 = vmul.f32 %v2880, 0.015625
      %v2945 = vmul.f32 %v2881, 0.015625
      %v2946 = vmul.f32 %v2882, 0.015625
      %v2947 = vmul.f32 %v2883, 0.015625
      %v2948 = vmul.f32 %v2884, 0.015625
      %v2949 = vmul.f32 %v2885, 0.015625
      %v2950 = vmul.f32 %v2886, 0.015625
      %v2951 = vmul.f32 %v2887, 0.015625
      %v2952 = vmul.f32 %v2888, 0.015625
      %v2953 = vmul.f32 %v2889, 0.015625
      %v2954 = vmul.f32 %v2890, 0.015625
      %v2955 = vmul.f32 %v2891, 0.015625
      %v2956 = vmul.f32 %v2892, 0.015625
      %v2957 = vmul.f32 %v2893, 0.015625
      %v2958 = vmul.f32 %v2894, 0.015625
      %v2959 = vmul.f32 %v2895, 0.015625
      %v2960 = vmul.f32 %v2896, 0.015625
      %v2961 = vmul.f32 %v2897, 0.015625
      %v2962 = vmul.f32 %v2898, 0.015625
      %v2963 = vmul.f32 %v2899, 0.015625
      %vm3028 = vcmask 1044484
      %v3029 = vsel %vm3028, %v2900, %v2900
      %vm3030 = vcmask 1046534
      %v3031 = vsel %vm3030, %v2900, %v3029
      %v3032 = vrot.slane %v2901, 7
      %vm3033 = vcmask 1041409
      %v3034 = vsel %vm3033, %v3032, %v3031
      %vm3035 = vcmask 1043459
      %v3036 = vsel %vm3035, %v3032, %v3034
      %vm3037 = vcmask 1045509
      %v3038 = vsel %vm3037, %v3032, %v3036
      %vm3039 = vcmask 1047559
      %v3040 = vsel %vm3039, %v3032, %v3038
      %v3041 = vsel %vm3028, %v2902, %v2902
      %v3042 = vsel %vm3030, %v2902, %v3041
      %v3043 = vrot.slane %v2903, 7
      %v3044 = vsel %vm3033, %v3043, %v3042
      %v3045 = vsel %vm3035, %v3043, %v3044
      %v3046 = vsel %vm3037, %v3043, %v3045
      %v3047 = vsel %vm3039, %v3043, %v3046
      %v3048 = vsel %vm3028, %v2904, %v2904
      %v3049 = vsel %vm3030, %v2904, %v3048
      %v3050 = vrot.slane %v2905, 7
      %v3051 = vsel %vm3033, %v3050, %v3049
      %v3052 = vsel %vm3035, %v3050, %v3051
      %v3053 = vsel %vm3037, %v3050, %v3052
      %v3054 = vsel %vm3039, %v3050, %v3053
      %v3055 = vsel %vm3028, %v2906, %v2906
      %v3056 = vsel %vm3030, %v2906, %v3055
      %v3057 = vrot.slane %v2907, 7
      %v3058 = vsel %vm3033, %v3057, %v3056
      %v3059 = vsel %vm3035, %v3057, %v3058
      %v3060 = vsel %vm3037, %v3057, %v3059
      %v3061 = vsel %vm3039, %v3057, %v3060
      %v3062 = vsel %vm3028, %v2908, %v2908
      %v3063 = vsel %vm3030, %v2908, %v3062
      %v3064 = vrot.slane %v2909, 7
      %v3065 = vsel %vm3033, %v3064, %v3063
      %v3066 = vsel %vm3035, %v3064, %v3065
      %v3067 = vsel %vm3037, %v3064, %v3066
      %v3068 = vsel %vm3039, %v3064, %v3067
      %v3069 = vsel %vm3028, %v2910, %v2910
      %v3070 = vsel %vm3030, %v2910, %v3069
      %v3071 = vrot.slane %v2911, 7
      %v3072 = vsel %vm3033, %v3071, %v3070
      %v3073 = vsel %vm3035, %v3071, %v3072
      %v3074 = vsel %vm3037, %v3071, %v3073
      %v3075 = vsel %vm3039, %v3071, %v3074
      %v3076 = vsel %vm3028, %v2912, %v2912
      %v3077 = vsel %vm3030, %v2912, %v3076
      %v3078 = vrot.slane %v2913, 7
      %v3079 = vsel %vm3033, %v3078, %v3077
      %v3080 = vsel %vm3035, %v3078, %v3079
      %v3081 = vsel %vm3037, %v3078, %v3080
      %v3082 = vsel %vm3039, %v3078, %v3081
      %v3083 = vsel %vm3028, %v2914, %v2914
      %v3084 = vsel %vm3030, %v2914, %v3083
      %v3085 = vrot.slane %v2915, 7
      %v3086 = vsel %vm3033, %v3085, %v3084
      %v3087 = vsel %vm3035, %v3085, %v3086
      %v3088 = vsel %vm3037, %v3085, %v3087
      %v3089 = vsel %vm3039, %v3085, %v3088
      %v3090 = vsel %vm3028, %v2916, %v2916
      %v3091 = vsel %vm3030, %v2916, %v3090
      %v3092 = vrot.slane %v2917, 7
      %v3093 = vsel %vm3033, %v3092, %v3091
      %v3094 = vsel %vm3035, %v3092, %v3093
      %v3095 = vsel %vm3037, %v3092, %v3094
      %v3096 = vsel %vm3039, %v3092, %v3095
      %v3097 = vsel %vm3028, %v2918, %v2918
      %v3098 = vsel %vm3030, %v2918, %v3097
      %v3099 = vrot.slane %v2919, 7
      %v3100 = vsel %vm3033, %v3099, %v3098
      %v3101 = vsel %vm3035, %v3099, %v3100
      %v3102 = vsel %vm3037, %v3099, %v3101
      %v3103 = vsel %vm3039, %v3099, %v3102
      %v3104 = vsel %vm3028, %v2920, %v2920
      %v3105 = vsel %vm3030, %v2920, %v3104
      %v3106 = vrot.slane %v2921, 7
      %v3107 = vsel %vm3033, %v3106, %v3105
      %v3108 = vsel %vm3035, %v3106, %v3107
      %v3109 = vsel %vm3037, %v3106, %v3108
      %v3110 = vsel %vm3039, %v3106, %v3109
      %v3111 = vsel %vm3028, %v2922, %v2922
      %v3112 = vsel %vm3030, %v2922, %v3111
      %v3113 = vrot.slane %v2923, 7
      %v3114 = vsel %vm3033, %v3113, %v3112
      %v3115 = vsel %vm3035, %v3113, %v3114
      %v3116 = vsel %vm3037, %v3113, %v3115
      %v3117 = vsel %vm3039, %v3113, %v3116
      %v3118 = vsel %vm3028, %v2924, %v2924
      %v3119 = vsel %vm3030, %v2924, %v3118
      %v3120 = vrot.slane %v2925, 7
      %v3121 = vsel %vm3033, %v3120, %v3119
      %v3122 = vsel %vm3035, %v3120, %v3121
      %v3123 = vsel %vm3037, %v3120, %v3122
      %v3124 = vsel %vm3039, %v3120, %v3123
      %v3125 = vsel %vm3028, %v2926, %v2926
      %v3126 = vsel %vm3030, %v2926, %v3125
      %v3127 = vrot.slane %v2927, 7
      %v3128 = vsel %vm3033, %v3127, %v3126
      %v3129 = vsel %vm3035, %v3127, %v3128
      %v3130 = vsel %vm3037, %v3127, %v3129
      %v3131 = vsel %vm3039, %v3127, %v3130
      %v3132 = vsel %vm3028, %v2928, %v2928
      %v3133 = vsel %vm3030, %v2928, %v3132
      %v3134 = vrot.slane %v2929, 7
      %v3135 = vsel %vm3033, %v3134, %v3133
      %v3136 = vsel %vm3035, %v3134, %v3135
      %v3137 = vsel %vm3037, %v3134, %v3136
      %v3138 = vsel %vm3039, %v3134, %v3137
      %v3139 = vsel %vm3028, %v2930, %v2930
      %v3140 = vsel %vm3030, %v2930, %v3139
      %v3141 = vrot.slane %v2931, 7
      %v3142 = vsel %vm3033, %v3141, %v3140
      %v3143 = vsel %vm3035, %v3141, %v3142
      %v3144 = vsel %vm3037, %v3141, %v3143
      %v3145 = vsel %vm3039, %v3141, %v3144
      %v3146 = vsel %vm3028, %v2932, %v2932
      %v3147 = vsel %vm3030, %v2932, %v3146
      %v3148 = vrot.slane %v2933, 7
      %v3149 = vsel %vm3033, %v3148, %v3147
      %v3150 = vsel %vm3035, %v3148, %v3149
      %v3151 = vsel %vm3037, %v3148, %v3150
      %v3152 = vsel %vm3039, %v3148, %v3151
      %v3153 = vsel %vm3028, %v2934, %v2934
      %v3154 = vsel %vm3030, %v2934, %v3153
      %v3155 = vrot.slane %v2935, 7
      %v3156 = vsel %vm3033, %v3155, %v3154
      %v3157 = vsel %vm3035, %v3155, %v3156
      %v3158 = vsel %vm3037, %v3155, %v3157
      %v3159 = vsel %vm3039, %v3155, %v3158
      %v3160 = vsel %vm3028, %v2936, %v2936
      %v3161 = vsel %vm3030, %v2936, %v3160
      %v3162 = vrot.slane %v2937, 7
      %v3163 = vsel %vm3033, %v3162, %v3161
      %v3164 = vsel %vm3035, %v3162, %v3163
      %v3165 = vsel %vm3037, %v3162, %v3164
      %v3166 = vsel %vm3039, %v3162, %v3165
      %v3167 = vsel %vm3028, %v2938, %v2938
      %v3168 = vsel %vm3030, %v2938, %v3167
      %v3169 = vrot.slane %v2939, 7
      %v3170 = vsel %vm3033, %v3169, %v3168
      %v3171 = vsel %vm3035, %v3169, %v3170
      %v3172 = vsel %vm3037, %v3169, %v3171
      %v3173 = vsel %vm3039, %v3169, %v3172
      %v3174 = vsel %vm3028, %v2940, %v2940
      %v3175 = vsel %vm3030, %v2940, %v3174
      %v3176 = vrot.slane %v2941, 7
      %v3177 = vsel %vm3033, %v3176, %v3175
      %v3178 = vsel %vm3035, %v3176, %v3177
      %v3179 = vsel %vm3037, %v3176, %v3178
      %v3180 = vsel %vm3039, %v3176, %v3179
      %v3181 = vsel %vm3028, %v2942, %v2942
      %v3182 = vsel %vm3030, %v2942, %v3181
      %v3183 = vrot.slane %v2943, 7
      %v3184 = vsel %vm3033, %v3183, %v3182
      %v3185 = vsel %vm3035, %v3183, %v3184
      %v3186 = vsel %vm3037, %v3183, %v3185
      %v3187 = vsel %vm3039, %v3183, %v3186
      %v3188 = vsel %vm3028, %v2944, %v2944
      %v3189 = vsel %vm3030, %v2944, %v3188
      %v3190 = vrot.slane %v2945, 7
      %v3191 = vsel %vm3033, %v3190, %v3189
      %v3192 = vsel %vm3035, %v3190, %v3191
      %v3193 = vsel %vm3037, %v3190, %v3192
      %v3194 = vsel %vm3039, %v3190, %v3193
      %v3195 = vsel %vm3028, %v2946, %v2946
      %v3196 = vsel %vm3030, %v2946, %v3195
      %v3197 = vrot.slane %v2947, 7
      %v3198 = vsel %vm3033, %v3197, %v3196
      %v3199 = vsel %vm3035, %v3197, %v3198
      %v3200 = vsel %vm3037, %v3197, %v3199
      %v3201 = vsel %vm3039, %v3197, %v3200
      %v3202 = vsel %vm3028, %v2948, %v2948
      %v3203 = vsel %vm3030, %v2948, %v3202
      %v3204 = vrot.slane %v2949, 7
      %v3205 = vsel %vm3033, %v3204, %v3203
      %v3206 = vsel %vm3035, %v3204, %v3205
      %v3207 = vsel %vm3037, %v3204, %v3206
      %v3208 = vsel %vm3039, %v3204, %v3207
      %v3209 = vsel %vm3028, %v2950, %v2950
      %v3210 = vsel %vm3030, %v2950, %v3209
      %v3211 = vrot.slane %v2951, 7
      %v3212 = vsel %vm3033, %v3211, %v3210
      %v3213 = vsel %vm3035, %v3211, %v3212
      %v3214 = vsel %vm3037, %v3211, %v3213
      %v3215 = vsel %vm3039, %v3211, %v3214
      %v3216 = vsel %vm3028, %v2952, %v2952
      %v3217 = vsel %vm3030, %v2952, %v3216
      %v3218 = vrot.slane %v2953, 7
      %v3219 = vsel %vm3033, %v3218, %v3217
      %v3220 = vsel %vm3035, %v3218, %v3219
      %v3221 = vsel %vm3037, %v3218, %v3220
      %v3222 = vsel %vm3039, %v3218, %v3221
      %v3223 = vsel %vm3028, %v2954, %v2954
      %v3224 = vsel %vm3030, %v2954, %v3223
      %v3225 = vrot.slane %v2955, 7
      %v3226 = vsel %vm3033, %v3225, %v3224
      %v3227 = vsel %vm3035, %v3225, %v3226
      %v3228 = vsel %vm3037, %v3225, %v3227
      %v3229 = vsel %vm3039, %v3225, %v3228
      %v3230 = vsel %vm3028, %v2956, %v2956
      %v3231 = vsel %vm3030, %v2956, %v3230
      %v3232 = vrot.slane %v2957, 7
      %v3233 = vsel %vm3033, %v3232, %v3231
      %v3234 = vsel %vm3035, %v3232, %v3233
      %v3235 = vsel %vm3037, %v3232, %v3234
      %v3236 = vsel %vm3039, %v3232, %v3235
      %v3237 = vsel %vm3028, %v2958, %v2958
      %v3238 = vsel %vm3030, %v2958, %v3237
      %v3239 = vrot.slane %v2959, 7
      %v3240 = vsel %vm3033, %v3239, %v3238
      %v3241 = vsel %vm3035, %v3239, %v3240
      %v3242 = vsel %vm3037, %v3239, %v3241
      %v3243 = vsel %vm3039, %v3239, %v3242
      %v3244 = vsel %vm3028, %v2960, %v2960
      %v3245 = vsel %vm3030, %v2960, %v3244
      %v3246 = vrot.slane %v2961, 7
      %v3247 = vsel %vm3033, %v3246, %v3245
      %v3248 = vsel %vm3035, %v3246, %v3247
      %v3249 = vsel %vm3037, %v3246, %v3248
      %v3250 = vsel %vm3039, %v3246, %v3249
      %v3251 = vsel %vm3028, %v2962, %v2962
      %v3252 = vsel %vm3030, %v2962, %v3251
      %v3253 = vrot.slane %v2963, 7
      %v3254 = vsel %vm3033, %v3253, %v3252
      %v3255 = vsel %vm3035, %v3253, %v3254
      %v3256 = vsel %vm3037, %v3253, %v3255
      %v3257 = vsel %vm3039, %v3253, %v3256
      %v3290 = vcombine.low %v3040, %v3068
      %v3292 = vunpack.c.l.s4 1934713408
      %v3293 = vunpack.c.0.s8 %v3292
      %v3294 = vlaneseq
      %v3295 = vshrl.u32 %v3294, 7
      %v3296 = vsub.s32 %v3293, %v3295
      %v3297 = vrot.slane %v3290, %v3296
      %v3298 = vcombine.high %v3297, 0.0
      %v3299 = vcombine.low %v3096, %v3124
      %v3301 = vunpack.c.l.s4 1934713408
      %v3302 = vunpack.c.0.s8 %v3301
      %v3303 = vlaneseq
      %v3304 = vshrl.u32 %v3303, 7
      %v3305 = vsub.s32 %v3302, %v3304
      %v3306 = vrot.slane %v3299, %v3305
      %v3307 = vcombine.high %v3306, 0.0
      %v3308 = vcombine.low %v3152, %v3180
      %v3310 = vunpack.c.l.s4 1934713408
      %v3311 = vunpack.c.0.s8 %v3310
      %v3312 = vlaneseq
      %v3313 = vshrl.u32 %v3312, 7
      %v3314 = vsub.s32 %v3311, %v3313
      %v3315 = vrot.slane %v3308, %v3314
      %v3316 = vcombine.high %v3315, 0.0
      %v3317 = vcombine.low %v3208, %v3236
      %v3319 = vunpack.c.l.s4 1934713408
      %v3320 = vunpack.c.0.s8 %v3319
      %v3321 = vlaneseq
      %v3322 = vshrl.u32 %v3321, 7
      %v3323 = vsub.s32 %v3320, %v3322
      %v3324 = vrot.slane %v3317, %v3323
      %v3325 = vcombine.high %v3324, 0.0
      %v3326 = vcombine.low %v3047, %v3075
      %v3328 = vunpack.c.l.s4 1934713408
      %v3329 = vunpack.c.0.s8 %v3328
      %v3330 = vlaneseq
      %v3331 = vshrl.u32 %v3330, 7
      %v3332 = vsub.s32 %v3329, %v3331
      %v3333 = vrot.slane %v3326, %v3332
      %v3334 = vcombine.high %v3333, 0.0
      %v3335 = vcombine.low %v3103, %v3131
      %v3337 = vunpack.c.l.s4 1934713408
      %v3338 = vunpack.c.0.s8 %v3337
      %v3339 = vlaneseq
      %v3340 = vshrl.u32 %v3339, 7
      %v3341 = vsub.s32 %v3338, %v3340
      %v3342 = vrot.slane %v3335, %v3341
      %v3343 = vcombine.high %v3342, 0.0
      %v3344 = vcombine.low %v3159, %v3187
      %v3346 = vunpack.c.l.s4 1934713408
      %v3347 = vunpack.c.0.s8 %v3346
      %v3348 = vlaneseq
      %v3349 = vshrl.u32 %v3348, 7
      %v3350 = vsub.s32 %v3347, %v3349
      %v3351 = vrot.slane %v3344, %v3350
      %v3352 = vcombine.high %v3351, 0.0
      %v3353 = vcombine.low %v3215, %v3243
      %v3355 = vunpack.c.l.s4 1934713408
      %v3356 = vunpack.c.0.s8 %v3355
      %v3357 = vlaneseq
      %v3358 = vshrl.u32 %v3357, 7
      %v3359 = vsub.s32 %v3356, %v3358
      %v3360 = vrot.slane %v3353, %v3359
      %v3361 = vcombine.high %v3360, 0.0
      %v3362 = vcombine.low %v3054, %v3082
      %v3364 = vunpack.c.l.s4 1934713408
      %v3365 = vunpack.c.0.s8 %v3364
      %v3366 = vlaneseq
      %v3367 = vshrl.u32 %v3366, 7
      %v3368 = vsub.s32 %v3365, %v3367
      %v3369 = vrot.slane %v3362, %v3368
      %v3370 = vcombine.high %v3369, 0.0
      %v3371 = vcombine.low %v3110, %v3138
      %v3373 = vunpack.c.l.s4 1934713408
      %v3374 = vunpack.c.0.s8 %v3373
      %v3375 = vlaneseq
      %v3376 = vshrl.u32 %v3375, 7
      %v3377 = vsub.s32 %v3374, %v3376
      %v3378 = vrot.slane %v3371, %v3377
      %v3379 = vcombine.high %v3378, 0.0
      %v3380 = vcombine.low %v3166, %v3194
      %v3382 = vunpack.c.l.s4 1934713408
      %v3383 = vunpack.c.0.s8 %v3382
      %v3384 = vlaneseq
      %v3385 = vshrl.u32 %v3384, 7
      %v3386 = vsub.s32 %v3383, %v3385
      %v3387 = vrot.slane %v3380, %v3386
      %v3388 = vcombine.high %v3387, 0.0
      %v3389 = vcombine.low %v3222, %v3250
      %v3391 = vunpack.c.l.s4 1934713408
      %v3392 = vunpack.c.0.s8 %v3391
      %v3393 = vlaneseq
      %v3394 = vshrl.u32 %v3393, 7
      %v3395 = vsub.s32 %v3392, %v3394
      %v3396 = vrot.slane %v3389, %v3395
      %v3397 = vcombine.high %v3396, 0.0
      %v3398 = vcombine.low %v3061, %v3089
      %v3400 = vunpack.c.l.s4 1934713408
      %v3401 = vunpack.c.0.s8 %v3400
      %v3402 = vlaneseq
      %v3403 = vshrl.u32 %v3402, 7
      %v3404 = vsub.s32 %v3401, %v3403
      %v3405 = vrot.slane %v3398, %v3404
      %v3406 = vcombine.high %v3405, 0.0
      %v3407 = vcombine.low %v3117, %v3145
      %v3409 = vunpack.c.l.s4 1934713408
      %v3410 = vunpack.c.0.s8 %v3409
      %v3411 = vlaneseq
      %v3412 = vshrl.u32 %v3411, 7
      %v3413 = vsub.s32 %v3410, %v3412
      %v3414 = vrot.slane %v3407, %v3413
      %v3415 = vcombine.high %v3414, 0.0
      %v3416 = vcombine.low %v3173, %v3201
      %v3418 = vunpack.c.l.s4 1934713408
      %v3419 = vunpack.c.0.s8 %v3418
      %v3420 = vlaneseq
      %v3421 = vshrl.u32 %v3420, 7
      %v3422 = vsub.s32 %v3419, %v3421
      %v3423 = vrot.slane %v3416, %v3422
      %v3424 = vcombine.high %v3423, 0.0
      %v3425 = vcombine.low %v3229, %v3257
      %v3427 = vunpack.c.l.s4 1934713408
      %v3428 = vunpack.c.0.s8 %v3427
      %v3429 = vlaneseq
      %v3430 = vshrl.u32 %v3429, 7
      %v3431 = vsub.s32 %v3428, %v3430
      %v3432 = vrot.slane %v3425, %v3431
      %v3433 = vcombine.high %v3432, 0.0
      %v3438 = vcombine.low %v3297, %v3306
      %v3439 = vcombine.low %v3315, %v3324
      %v3441 = vunpack.c.l.s4 1983009808
      %v3442 = vunpack.c.0.s8 %v3441
      %v3443 = vlaneseq
      %v3444 = vshrl.u32 %v3443, 7
      %v3445 = vsub.s32 %v3442, %v3444
      %v3446 = vrot.slane %v3438, %v3445
      %v3448 = vunpack.c.l.s4 1983009808
      %v3449 = vunpack.c.0.s8 %v3448
      %v3450 = vlaneseq
      %v3451 = vshrl.u32 %v3450, 7
      %v3452 = vsub.s32 %v3449, %v3451
      %v3453 = vrot.slane %v3439, %v3452
      %v3454 = vcombine.low %v3446, %v3453
      %v3460 = vcombine.low %v3298, %v3307
      %v3461 = vcombine.low %v3316, %v3325
      %v3463 = vunpack.c.l.s4 1983009808
      %v3464 = vunpack.c.0.s8 %v3463
      %v3465 = vlaneseq
      %v3466 = vshrl.u32 %v3465, 7
      %v3467 = vsub.s32 %v3464, %v3466
      %v3468 = vrot.slane %v3460, %v3467
      %v3470 = vunpack.c.l.s4 1983009808
      %v3471 = vunpack.c.0.s8 %v3470
      %v3472 = vlaneseq
      %v3473 = vshrl.u32 %v3472, 7
      %v3474 = vsub.s32 %v3471, %v3473
      %v3475 = vrot.slane %v3461, %v3474
      %v3476 = vcombine.low %v3468, %v3475
      %3477 = vrot.lane.b32.xlu0 %v3476, 8
      %v3478 = vpop.permute.xlu0 %3477
      %v3484 = vcombine.low %v3333, %v3342
      %v3485 = vcombine.low %v3351, %v3360
      %v3487 = vunpack.c.l.s4 1983009808
      %v3488 = vunpack.c.0.s8 %v3487
      %v3489 = vlaneseq
      %v3490 = vshrl.u32 %v3489, 7
      %v3491 = vsub.s32 %v3488, %v3490
      %v3492 = vrot.slane %v3484, %v3491
      %v3494 = vunpack.c.l.s4 1983009808
      %v3495 = vunpack.c.0.s8 %v3494
      %v3496 = vlaneseq
      %v3497 = vshrl.u32 %v3496, 7
      %v3498 = vsub.s32 %v3495, %v3497
      %v3499 = vrot.slane %v3485, %v3498
      %v3500 = vcombine.low %v3492, %v3499
      %3501 = vrot.lane.b32.xlu0 %v3500, 16
      %v3502 = vpop.permute.xlu0 %3501
      %v3508 = vcombine.low %v3334, %v3343
      %v3509 = vcombine.low %v3352, %v3361
      %v3511 = vunpack.c.l.s4 1983009808
      %v3512 = vunpack.c.0.s8 %v3511
      %v3513 = vlaneseq
      %v3514 = vshrl.u32 %v3513, 7
      %v3515 = vsub.s32 %v3512, %v3514
      %v3516 = vrot.slane %v3508, %v3515
      %v3518 = vunpack.c.l.s4 1983009808
      %v3519 = vunpack.c.0.s8 %v3518
      %v3520 = vlaneseq
      %v3521 = vshrl.u32 %v3520, 7
      %v3522 = vsub.s32 %v3519, %v3521
      %v3523 = vrot.slane %v3509, %v3522
      %v3524 = vcombine.low %v3516, %v3523
      %3525 = vrot.lane.b32.xlu0 %v3524, 24
      %v3526 = vpop.permute.xlu0 %3525
      %v3532 = vcombine.low %v3369, %v3378
      %v3533 = vcombine.low %v3387, %v3396
      %v3535 = vunpack.c.l.s4 1983009808
      %v3536 = vunpack.c.0.s8 %v3535
      %v3537 = vlaneseq
      %v3538 = vshrl.u32 %v3537, 7
      %v3539 = vsub.s32 %v3536, %v3538
      %v3540 = vrot.slane %v3532, %v3539
      %v3542 = vunpack.c.l.s4 1983009808
      %v3543 = vunpack.c.0.s8 %v3542
      %v3544 = vlaneseq
      %v3545 = vshrl.u32 %v3544, 7
      %v3546 = vsub.s32 %v3543, %v3545
      %v3547 = vrot.slane %v3533, %v3546
      %v3548 = vcombine.low %v3540, %v3547
      %3549 = vrot.lane.b32.xlu0 %v3548, 32
      %v3550 = vpop.permute.xlu0 %3549
      %v3556 = vcombine.low %v3370, %v3379
      %v3557 = vcombine.low %v3388, %v3397
      %v3559 = vunpack.c.l.s4 1983009808
      %v3560 = vunpack.c.0.s8 %v3559
      %v3561 = vlaneseq
      %v3562 = vshrl.u32 %v3561, 7
      %v3563 = vsub.s32 %v3560, %v3562
      %v3564 = vrot.slane %v3556, %v3563
      %v3566 = vunpack.c.l.s4 1983009808
      %v3567 = vunpack.c.0.s8 %v3566
      %v3568 = vlaneseq
      %v3569 = vshrl.u32 %v3568, 7
      %v3570 = vsub.s32 %v3567, %v3569
      %v3571 = vrot.slane %v3557, %v3570
      %v3572 = vcombine.low %v3564, %v3571
      %3573 = vrot.lane.b32.xlu0 %v3572, 40
      %v3574 = vpop.permute.xlu0 %3573
      %v3580 = vcombine.low %v3405, %v3414
      %v3581 = vcombine.low %v3423, %v3432
      %v3583 = vunpack.c.l.s4 1983009808
      %v3584 = vunpack.c.0.s8 %v3583
      %v3585 = vlaneseq
      %v3586 = vshrl.u32 %v3585, 7
      %v3587 = vsub.s32 %v3584, %v3586
      %v3588 = vrot.slane %v3580, %v3587
      %v3590 = vunpack.c.l.s4 1983009808
      %v3591 = vunpack.c.0.s8 %v3590
      %v3592 = vlaneseq
      %v3593 = vshrl.u32 %v3592, 7
      %v3594 = vsub.s32 %v3591, %v3593
      %v3595 = vrot.slane %v3581, %v3594
      %v3596 = vcombine.low %v3588, %v3595
      %3597 = vrot.lane.b32.xlu0 %v3596, 48
      %v3598 = vpop.permute.xlu0 %3597
      %v3604 = vcombine.low %v3406, %v3415
      %v3605 = vcombine.low %v3424, %v3433
      %v3607 = vunpack.c.l.s4 1983009808
      %v3608 = vunpack.c.0.s8 %v3607
      %v3609 = vlaneseq
      %v3610 = vshrl.u32 %v3609, 7
      %v3611 = vsub.s32 %v3608, %v3610
      %v3612 = vrot.slane %v3604, %v3611
      %v3614 = vunpack.c.l.s4 1983009808
      %v3615 = vunpack.c.0.s8 %v3614
      %v3616 = vlaneseq
      %v3617 = vshrl.u32 %v3616, 7
      %v3618 = vsub.s32 %v3615, %v3617
      %v3619 = vrot.slane %v3605, %v3618
      %v3620 = vcombine.low %v3612, %v3619
      %3621 = vrot.lane.b32.xlu0 %v3620, 56
      %v3622 = vpop.permute.xlu0 %3621
      %v3624 = vsel %vm1035, %v3454, %v3478
      %v3625 = vsel %vm1101, %v3624, %v3502
      %v3626 = vsel %vm1167, %v3625, %v3526
      %v3627 = vsel %vm1233, %v3626, %v3550
      %vm3628 = vcmask 326656
      %v3629 = vsel %vm3628, %v3627, %v3574
      %vm3630 = vcmask 392192
      %v3631 = vsel %vm3630, %v3629, %v3598
      %vm3632 = vcmask 457728
      %v3633 = vsel %vm3632, %v3631, %v3622
      %vm3634 = vcmask 523264
      %3635 = vst.msk [vmem:[%s168] sm:$0xff] %vm3634, %v3633
      %p3636 = scmp.lt.s32.totalorder %s14, 1
      %s3637 = scalar_select %p3636, %s14, 1
      %s3638 = smul.addr %s3637, 8
      %s3639 = scalar_lea.vmem %s3, %s3638
      // Predicated region
      $region33: #{blur_down_forward.1} parent=31 // pred_check
        %p3640 = pneg %p100
      $region34: #{blur_down_forward.1} parent=31 // pred_check_branch
        %3642 = sbr.rel (%p3640) target = $region36
      $region35: #{blur_down_forward.1} parent=31 // pred_region
        _
      $region36: #{blur_down_forward.1} parent=31 // pred_fallthru
        _
    $region32: #{blur_down_forward.1} parent=5 // pred_fallthru
      _
    %p3643 = scmp.le.s32.totalorder 2, %s9
    // Predicated region
    $region37: #{blur_down_forward.1} parent=5 // pred_check
      %p3644 = pneg %p3643
    $region38: #{blur_down_forward.1} parent=5 // pred_check_branch
      %3646 = sbr.rel (%p3644) target = $region40
    $region39: #{blur_down_forward.1} parent=5 // pred_region
      %s3647 = ssub.s32 %s9, 2
      // Predicated region
      $region41: #{blur_down_forward.1} parent=39 // pred_check
        %p3648 = pneg %p106
      $region42: #{blur_down_forward.1} parent=39 // pred_check_branch
        %3650 = sbr.rel (%p3648) target = $region44
      $region43: #{blur_down_forward.1} parent=39 // pred_region
        %p3651 = scmp.lt.s32.totalorder %s15, 1
        %s3652 = scalar_select %p3651, %s15, 1
        %s3653 = smul.addr %s3652, 8
        %s3654 = scalar_lea.vmem %s3, %s3653
      $region44: #{blur_down_forward.1} parent=39 // pred_fallthru
        _
    $region40: #{blur_down_forward.1} parent=5 // pred_fallthru
      _
  $region6: #{blur_down_forward.1} parent=0 // loop_footer
    %s13 = sadd.s32 1, %s9
  $region7: #{blur_down_forward.1} parent=0 // loop_footer_branch
    %8 = sbr.rel target = $region3
  $region8: #{blur_down_forward.1} parent=0 // loop_exit
    _

</llo_original>
